<compile_context>
chip_gen: v6e
topology: v6e:2x2x1
jax: 0.10.0
libtpu: 0.0.40
codegen_flags: <defaults>
</compile_context>

<pallas_src>
import functools

import jax
import jax.numpy as jnp
import numpy as np
from jax.experimental import pallas as pl
from jax.experimental.pallas import tpu as pltpu


# ---------------------------------------------------------------------------
# Fused bidirectional-LSTM + Linear kernel (single pallas_call, grid=())
# ---------------------------------------------------------------------------
def _bilstm_kernel(x_ref, w_ih_ref, w_hh_ref, b_ref, lin_w_ref, lin_b_ref,
                   out_ref, rec_ref, *, seq_len, batch, hidden_size):
    T, B, H = seq_len, batch, hidden_size

    # ---- input-gate contributions for ALL timesteps & BOTH directions ------
    # One MXU matmul; biases folded in once (hoisted out of the hot loop).
    # Column layout of the 8H axis: [fwd i,f,g,o (4H) | bwd i,f,g,o (4H)].
    gates_in = (jnp.dot(x_ref[...], w_ih_ref[...],
                        preferred_element_type=jnp.float32)
                + b_ref[...])                                  # (T*B, 8H)

    # ---- recurrence: fully unrolled (T is small & static) ------------------
    # h/c carry both directions: columns [0:H]=fwd state, [H:2H]=bwd state.
    h = jnp.zeros((B, 2 * H), jnp.float32)
    c = jnp.zeros((B, 2 * H), jnp.float32)

    for t in range(T):
        # One wide (B, 2H) @ (2H, 8H) block-diagonal MXU matmul produces the
        # recurrent term for both directions at once.
        rec = jnp.dot(h, w_hh_ref[...], preferred_element_type=jnp.float32)

        # fwd direction consumes x[t]; bwd direction consumes x[T-1-t].
        gf = gates_in[t * B:(t + 1) * B, 0:4 * H] + rec[:, 0:4 * H]
        gb = (gates_in[(T - 1 - t) * B:(T - t) * B, 4 * H:8 * H]
              + rec[:, 4 * H:8 * H])

        i_f = jax.nn.sigmoid(gf[:, 0 * H:1 * H])
        f_f = jax.nn.sigmoid(gf[:, 1 * H:2 * H])
        g_f = jnp.tanh(gf[:, 2 * H:3 * H])
        o_f = jax.nn.sigmoid(gf[:, 3 * H:4 * H])

        i_b = jax.nn.sigmoid(gb[:, 0 * H:1 * H])
        f_b = jax.nn.sigmoid(gb[:, 1 * H:2 * H])
        g_b = jnp.tanh(gb[:, 2 * H:3 * H])
        o_b = jax.nn.sigmoid(gb[:, 3 * H:4 * H])

        c_f = f_f * c[:, 0:H] + i_f * g_f
        c_b = f_b * c[:, H:2 * H] + i_b * g_b
        h_f = o_f * jnp.tanh(c_f)
        h_b = o_b * jnp.tanh(c_b)

        h = jnp.concatenate([h_f, h_b], axis=-1)
        c = jnp.concatenate([c_f, c_b], axis=-1)

        # fwd hidden at step t belongs to output time t; bwd hidden at step t
        # belongs to output time T-1-t (it has seen inputs T-1..T-1-t).
        rec_ref[t * B:(t + 1) * B, 0:H] = h_f
        rec_ref[(T - 1 - t) * B:(T - t) * B, H:2 * H] = h_b

    # ---- fused Linear (2H -> OUT) over the VMEM-resident slab --------------
    out_ref[...] = (jnp.dot(rec_ref[...], lin_w_ref[...],
                            preferred_element_type=jnp.float32)
                    + lin_b_ref[...])


def bidirectional_lstm_forward(x, params, hidden_size):
    """x: (T, B, I) -> (T, B, OUT). Fused bi-LSTM + Linear, one kernel."""
    T, B, I = x.shape
    H = hidden_size
    OUT = params["lin_w_t"].shape[1]
    x2d = x.reshape(T * B, I)

    kernel = functools.partial(_bilstm_kernel, seq_len=T, batch=B,
                               hidden_size=H)
    out2d = pl.pallas_call(
        kernel,
        out_shape=jax.ShapeDtypeStruct((T * B, OUT), jnp.float32),
        grid=(),
        in_specs=[
            pl.BlockSpec((T * B, I), lambda: (0, 0)),          # x (flattened)
            pl.BlockSpec((I, 8 * H), lambda: (0, 0)),          # W_ih (both dirs)
            pl.BlockSpec((2 * H, 8 * H), lambda: (0, 0)),      # W_hh block-diag
            pl.BlockSpec((1, 8 * H), lambda: (0, 0)),          # folded biases
            pl.BlockSpec((2 * H, OUT), lambda: (0, 0)),        # Linear W^T
            pl.BlockSpec((1, OUT), lambda: (0, 0)),            # Linear bias
        ],
        out_specs=pl.BlockSpec((T * B, OUT), lambda: (0, 0)),
        scratch_shapes=[
            pltpu.VMEM((T * B, 2 * H), jnp.float32),           # recurrent slab
        ],
    )(x2d, params["w_ih_cat"], params["w_hh_bd"], params["b_cat"],
      params["lin_w_t"], params["lin_b"])
    return out2d.reshape(T, B, OUT)


# ---------------------------------------------------------------------------
# Pure-JAX reference (for correctness check) -- uses the original per-direction
# PyTorch-layout weights, matching nn.LSTM(bidirectional=True) + nn.Linear.
# ---------------------------------------------------------------------------
def _ref_direction(x, w_ih_t, w_hh_t, b, H):
    B = x.shape[1]

    def step(carry, x_t):
        h, c = carry
        gates = x_t @ w_ih_t + h @ w_hh_t + b[0]
        i = jax.nn.sigmoid(gates[:, 0 * H:1 * H])
        f = jax.nn.sigmoid(gates[:, 1 * H:2 * H])
        g = jnp.tanh(gates[:, 2 * H:3 * H])
        o = jax.nn.sigmoid(gates[:, 3 * H:4 * H])
        c = f * c + i * g
        h = o * jnp.tanh(c)
        return (h, c), h

    init = (jnp.zeros((B, H), jnp.float32), jnp.zeros((B, H), jnp.float32))
    _, hs = jax.lax.scan(step, init, x)
    return hs


def reference_forward(x, ref_params, H):
    h_fwd = _ref_direction(x, ref_params["w_ih_fwd_t"], ref_params["w_hh_fwd_t"],
                           ref_params["b_fwd"], H)
    h_bwd = _ref_direction(x[::-1], ref_params["w_ih_bwd_t"],
                           ref_params["w_hh_bwd_t"], ref_params["b_bwd"], H)[::-1]
    rec = jnp.concatenate([h_fwd, h_bwd], axis=-1)
    return rec @ ref_params["lin_w_t"] + ref_params["lin_b"][0]


# ---------------------------------------------------------------------------
# main
# ---------------------------------------------------------------------------
if __name__ == "__main__":
    # Small shapes consistent with the module: seq=8, batch=2, input=16,
    # hidden=32, output=16 (bidirectional=True, with_linear=True).
    T, B, I, H, OUT = 8, 2, 16, 32, 16

    key = jax.random.PRNGKey(0)
    keys = jax.random.split(key, 12)
    bound = 1.0 / np.sqrt(H)   # PyTorch nn.LSTM / nn.Linear init range

    def u(k, shape):
        return jax.random.uniform(k, shape, jnp.float32, -bound, bound)

    # PyTorch LSTM parameter shapes: weight_ih (4H, I), weight_hh (4H, H),
    # bias_ih (4H,), bias_hh (4H,); one set per direction.
    w_ih_fwd = u(keys[0], (4 * H, I))
    w_hh_fwd = u(keys[1], (4 * H, H))
    b_ih_fwd = u(keys[2], (4 * H,))
    b_hh_fwd = u(keys[3], (4 * H,))
    w_ih_bwd = u(keys[4], (4 * H, I))
    w_hh_bwd = u(keys[5], (4 * H, H))
    b_ih_bwd = u(keys[6], (4 * H,))
    b_hh_bwd = u(keys[7], (4 * H,))
    # Linear: weight (OUT, 2H), bias (OUT,)
    lin_w = u(keys[8], (OUT, 2 * H))
    lin_b = u(keys[9], (OUT,))

    # ---- kernel-side parameter packing (done once, outside the kernel) -----
    # Both directions' input weights side by side: (I, 8H).
    w_ih_cat = jnp.concatenate([w_ih_fwd.T, w_ih_bwd.T], axis=1)
    # Block-diagonal recurrent weight: (2H, 8H).
    #   rows 0:H  (h_fwd) feed columns 0:4H  (fwd gates)
    #   rows H:2H (h_bwd) feed columns 4H:8H (bwd gates)
    w_hh_bd = jnp.zeros((2 * H, 8 * H), jnp.float32)
    w_hh_bd = w_hh_bd.at[0:H, 0:4 * H].set(w_hh_fwd.T)
    w_hh_bd = w_hh_bd.at[H:2 * H, 4 * H:8 * H].set(w_hh_bwd.T)
    # Folded biases (b_ih + b_hh) per direction: (1, 8H).
    b_cat = jnp.concatenate([b_ih_fwd + b_hh_fwd,
                             b_ih_bwd + b_hh_bwd]).reshape(1, 8 * H)

    params = dict(
        w_ih_cat=w_ih_cat,
        w_hh_bd=w_hh_bd,
        b_cat=b_cat,
        lin_w_t=lin_w.T,                       # (2H, OUT)
        lin_b=lin_b.reshape(1, OUT),
    )

    ref_params = dict(
        w_ih_fwd_t=w_ih_fwd.T, w_hh_fwd_t=w_hh_fwd.T,
        b_fwd=(b_ih_fwd + b_hh_fwd).reshape(1, 4 * H),
        w_ih_bwd_t=w_ih_bwd.T, w_hh_bwd_t=w_hh_bwd.T,
        b_bwd=(b_ih_bwd + b_hh_bwd).reshape(1, 4 * H),
        lin_w_t=lin_w.T, lin_b=lin_b.reshape(1, OUT),
    )

    # Input: (seq_len, batch, input_size)
    x = jax.random.normal(keys[10], (T, B, I), jnp.float32)

    out = bidirectional_lstm_forward(x, params, H)
    out = jax.block_until_ready(out)

    ref = jax.block_until_ready(reference_forward(x, ref_params, H))
    np.testing.assert_allclose(np.asarray(out), np.asarray(ref),
                               rtol=1e-5, atol=1e-5)

    assert out.shape == (T, B, OUT)
    print("KERNEL_OK")
</pallas_src>

<mosaic_0001>
module attributes {stable_mosaic.version = 11 : i64} {
  func.func @_bilstm_kernel(%arg0: memref<16x16xf32, #tpu.memory_space<vmem>>, %arg1: memref<16x256xf32, #tpu.memory_space<vmem>>, %arg2: memref<64x256xf32, #tpu.memory_space<vmem>>, %arg3: memref<1x256xf32, #tpu.memory_space<vmem>>, %arg4: memref<64x16xf32, #tpu.memory_space<vmem>>, %arg5: memref<1x16xf32, #tpu.memory_space<vmem>>, %arg6: memref<16x16xf32, #tpu.memory_space<vmem>>, %arg7: memref<16x64xf32, #tpu.memory_space<vmem>>) attributes {dimension_semantics = [], scalar_prefetch = 0 : i64, scratch_operands = 1 : i64, tpu.core_type = #tpu.core_type<tc>} {
    %c0 = arith.constant 0 : index
    %c0_0 = arith.constant 0 : index
    %0 = vector.load %arg0[%c0, %c0_0] : memref<16x16xf32, #tpu.memory_space<vmem>>, vector<16x16xf32>
    %c0_1 = arith.constant 0 : index
    %c0_2 = arith.constant 0 : index
    %1 = vector.load %arg1[%c0_1, %c0_2] : memref<16x256xf32, #tpu.memory_space<vmem>>, vector<16x256xf32>
    %cst = arith.constant dense<0.000000e+00> : vector<16x256xf32>
    %2 = tpu.matmul %0, %1, %cst {dimension_numbers = #tpu.dot_dimension_numbers<[1], [0], [0], [1], [0, 0, 1, 1], [], []>} : vector<16x16xf32>, vector<16x256xf32>, vector<16x256xf32> -> vector<16x256xf32>
    %c0_3 = arith.constant 0 : index
    %c0_4 = arith.constant 0 : index
    %3 = vector.load %arg3[%c0_3, %c0_4] : memref<1x256xf32, #tpu.memory_space<vmem>>, vector<1x256xf32>
    %4 = vector.broadcast %3 : vector<1x256xf32> to vector<16x256xf32>
    %5 = arith.addf %2, %4 : vector<16x256xf32>
    %cst_5 = arith.constant 0.000000e+00 : f32
    %6 = vector.broadcast %cst_5 : f32 to vector<2x64xf32>
    %cst_6 = arith.constant 0.000000e+00 : f32
    %7 = vector.broadcast %cst_6 : f32 to vector<2x64xf32>
    %c0_7 = arith.constant 0 : index
    %c0_8 = arith.constant 0 : index
    %8 = vector.load %arg2[%c0_7, %c0_8] : memref<64x256xf32, #tpu.memory_space<vmem>>, vector<64x256xf32>
    %cst_9 = arith.constant dense<0.000000e+00> : vector<2x256xf32>
    %9 = tpu.matmul %6, %8, %cst_9 {dimension_numbers = #tpu.dot_dimension_numbers<[1], [0], [0], [1], [0, 0, 1, 1], [], []>} : vector<2x64xf32>, vector<64x256xf32>, vector<2x256xf32> -> vector<2x256xf32>
    %10 = vector.extract_strided_slice %5 {offsets = [0, 0], sizes = [2, 128], strides = [1, 1]} : vector<16x256xf32> to vector<2x128xf32>
    %11 = vector.extract_strided_slice %9 {offsets = [0, 0], sizes = [2, 128], strides = [1, 1]} : vector<2x256xf32> to vector<2x128xf32>
    %12 = arith.addf %10, %11 : vector<2x128xf32>
    %13 = vector.extract_strided_slice %5 {offsets = [14, 128], sizes = [2, 128], strides = [1, 1]} : vector<16x256xf32> to vector<2x128xf32>
    %14 = vector.extract_strided_slice %9 {offsets = [0, 128], sizes = [2, 128], strides = [1, 1]} : vector<2x256xf32> to vector<2x128xf32>
    %15 = arith.addf %13, %14 : vector<2x128xf32>
    %16 = vector.extract_strided_slice %12 {offsets = [0, 0], sizes = [2, 32], strides = [1, 1]} : vector<2x128xf32> to vector<2x32xf32>
    %17 = arith.negf %16 : vector<2x32xf32>
    %18 = math.exp %17 : vector<2x32xf32>
    %cst_10 = arith.constant 1.000000e+00 : f32
    %19 = vector.broadcast %cst_10 : f32 to vector<2x32xf32>
    %20 = arith.addf %19, %18 : vector<2x32xf32>
    %21 = arith.divf %19, %20 : vector<2x32xf32>
    %22 = vector.extract_strided_slice %12 {offsets = [0, 32], sizes = [2, 32], strides = [1, 1]} : vector<2x128xf32> to vector<2x32xf32>
    %23 = arith.negf %22 : vector<2x32xf32>
    %24 = math.exp %23 : vector<2x32xf32>
    %cst_11 = arith.constant 1.000000e+00 : f32
    %25 = vector.broadcast %cst_11 : f32 to vector<2x32xf32>
    %26 = arith.addf %25, %24 : vector<2x32xf32>
    %27 = arith.divf %25, %26 : vector<2x32xf32>
    %28 = vector.extract_strided_slice %12 {offsets = [0, 64], sizes = [2, 32], strides = [1, 1]} : vector<2x128xf32> to vector<2x32xf32>
    %29 = math.tanh %28 : vector<2x32xf32>
    %30 = vector.extract_strided_slice %12 {offsets = [0, 96], sizes = [2, 32], strides = [1, 1]} : vector<2x128xf32> to vector<2x32xf32>
    %31 = arith.negf %30 : vector<2x32xf32>
    %32 = math.exp %31 : vector<2x32xf32>
    %cst_12 = arith.constant 1.000000e+00 : f32
    %33 = vector.broadcast %cst_12 : f32 to vector<2x32xf32>
    %34 = arith.addf %33, %32 : vector<2x32xf32>
    %35 = arith.divf %33, %34 : vector<2x32xf32>
    %36 = vector.extract_strided_slice %15 {offsets = [0, 0], sizes = [2, 32], strides = [1, 1]} : vector<2x128xf32> to vector<2x32xf32>
    %37 = arith.negf %36 : vector<2x32xf32>
    %38 = math.exp %37 : vector<2x32xf32>
    %cst_13 = arith.constant 1.000000e+00 : f32
    %39 = vector.broadcast %cst_13 : f32 to vector<2x32xf32>
    %40 = arith.addf %39, %38 : vector<2x32xf32>
    %41 = arith.divf %39, %40 : vector<2x32xf32>
    %42 = vector.extract_strided_slice %15 {offsets = [0, 32], sizes = [2, 32], strides = [1, 1]} : vector<2x128xf32> to vector<2x32xf32>
    %43 = arith.negf %42 : vector<2x32xf32>
    %44 = math.exp %43 : vector<2x32xf32>
    %cst_14 = arith.constant 1.000000e+00 : f32
    %45 = vector.broadcast %cst_14 : f32 to vector<2x32xf32>
    %46 = arith.addf %45, %44 : vector<2x32xf32>
    %47 = arith.divf %45, %46 : vector<2x32xf32>
    %48 = vector.extract_strided_slice %15 {offsets = [0, 64], sizes = [2, 32], strides = [1, 1]} : vector<2x128xf32> to vector<2x32xf32>
    %49 = math.tanh %48 : vector<2x32xf32>
    %50 = vector.extract_strided_slice %15 {offsets = [0, 96], sizes = [2, 32], strides = [1, 1]} : vector<2x128xf32> to vector<2x32xf32>
    %51 = arith.negf %50 : vector<2x32xf32>
    %52 = math.exp %51 : vector<2x32xf32>
    %cst_15 = arith.constant 1.000000e+00 : f32
    %53 = vector.broadcast %cst_15 : f32 to vector<2x32xf32>
    %54 = arith.addf %53, %52 : vector<2x32xf32>
    %55 = arith.divf %53, %54 : vector<2x32xf32>
    %56 = vector.extract_strided_slice %7 {offsets = [0, 0], sizes = [2, 32], strides = [1, 1]} : vector<2x64xf32> to vector<2x32xf32>
    %57 = arith.mulf %27, %56 : vector<2x32xf32>
    %58 = arith.mulf %21, %29 : vector<2x32xf32>
    %59 = arith.addf %57, %58 : vector<2x32xf32>
    %60 = vector.extract_strided_slice %7 {offsets = [0, 32], sizes = [2, 32], strides = [1, 1]} : vector<2x64xf32> to vector<2x32xf32>
    %61 = arith.mulf %47, %60 : vector<2x32xf32>
    %62 = arith.mulf %41, %49 : vector<2x32xf32>
    %63 = arith.addf %61, %62 : vector<2x32xf32>
    %64 = math.tanh %59 : vector<2x32xf32>
    %65 = arith.mulf %35, %64 : vector<2x32xf32>
    %66 = math.tanh %63 : vector<2x32xf32>
    %67 = arith.mulf %55, %66 : vector<2x32xf32>
    %68 = tpu.concatenate %65, %67 in 1 : vector<2x32xf32>, vector<2x32xf32> -> vector<2x64xf32>
    %69 = tpu.concatenate %59, %63 in 1 : vector<2x32xf32>, vector<2x32xf32> -> vector<2x64xf32>
    %c0_16 = arith.constant 0 : index
    %c0_17 = arith.constant 0 : index
    %70 = vector.load %arg7[%c0_16, %c0_17] : memref<16x64xf32, #tpu.memory_space<vmem>>, vector<2x32xf32>
    tpu.vector_store %arg7[%c0_16, %c0_17], %65 {strides = array<i32>} : memref<16x64xf32, #tpu.memory_space<vmem>>, vector<2x32xf32>,
    %c14 = arith.constant 14 : index
    %c32 = arith.constant 32 : index
    %71 = vector.load %arg7[%c14, %c32] : memref<16x64xf32, #tpu.memory_space<vmem>>, vector<2x32xf32>
    tpu.vector_store %arg7[%c14, %c32], %67 {strides = array<i32>} : memref<16x64xf32, #tpu.memory_space<vmem>>, vector<2x32xf32>,
    %c0_18 = arith.constant 0 : index
    %c0_19 = arith.constant 0 : index
    %72 = vector.load %arg2[%c0_18, %c0_19] : memref<64x256xf32, #tpu.memory_space<vmem>>, vector<64x256xf32>
    %cst_20 = arith.constant dense<0.000000e+00> : vector<2x256xf32>
    %73 = tpu.matmul %68, %72, %cst_20 {dimension_numbers = #tpu.dot_dimension_numbers<[1], [0], [0], [1], [0, 0, 1, 1], [], []>} : vector<2x64xf32>, vector<64x256xf32>, vector<2x256xf32> -> vector<2x256xf32>
    %74 = vector.extract_strided_slice %5 {offsets = [2, 0], sizes = [2, 128], strides = [1, 1]} : vector<16x256xf32> to vector<2x128xf32>
    %75 = vector.extract_strided_slice %73 {offsets = [0, 0], sizes = [2, 128], strides = [1, 1]} : vector<2x256xf32> to vector<2x128xf32>
    %76 = arith.addf %74, %75 : vector<2x128xf32>
    %77 = vector.extract_strided_slice %5 {offsets = [12, 128], sizes = [2, 128], strides = [1, 1]} : vector<16x256xf32> to vector<2x128xf32>
    %78 = vector.extract_strided_slice %73 {offsets = [0, 128], sizes = [2, 128], strides = [1, 1]} : vector<2x256xf32> to vector<2x128xf32>
    %79 = arith.addf %77, %78 : vector<2x128xf32>
    %80 = vector.extract_strided_slice %76 {offsets = [0, 0], sizes = [2, 32], strides = [1, 1]} : vector<2x128xf32> to vector<2x32xf32>
    %81 = arith.negf %80 : vector<2x32xf32>
    %82 = math.exp %81 : vector<2x32xf32>
    %cst_21 = arith.constant 1.000000e+00 : f32
    %83 = vector.broadcast %cst_21 : f32 to vector<2x32xf32>
    %84 = arith.addf %83, %82 : vector<2x32xf32>
    %85 = arith.divf %83, %84 : vector<2x32xf32>
    %86 = vector.extract_strided_slice %76 {offsets = [0, 32], sizes = [2, 32], strides = [1, 1]} : vector<2x128xf32> to vector<2x32xf32>
    %87 = arith.negf %86 : vector<2x32xf32>
    %88 = math.exp %87 : vector<2x32xf32>
    %cst_22 = arith.constant 1.000000e+00 : f32
    %89 = vector.broadcast %cst_22 : f32 to vector<2x32xf32>
    %90 = arith.addf %89, %88 : vector<2x32xf32>
    %91 = arith.divf %89, %90 : vector<2x32xf32>
    %92 = vector.extract_strided_slice %76 {offsets = [0, 64], sizes = [2, 32], strides = [1, 1]} : vector<2x128xf32> to vector<2x32xf32>
    %93 = math.tanh %92 : vector<2x32xf32>
    %94 = vector.extract_strided_slice %76 {offsets = [0, 96], sizes = [2, 32], strides = [1, 1]} : vector<2x128xf32> to vector<2x32xf32>
    %95 = arith.negf %94 : vector<2x32xf32>
    %96 = math.exp %95 : vector<2x32xf32>
    %cst_23 = arith.constant 1.000000e+00 : f32
    %97 = vector.broadcast %cst_23 : f32 to vector<2x32xf32>
    %98 = arith.addf %97, %96 : vector<2x32xf32>
    %99 = arith.divf %97, %98 : vector<2x32xf32>
    %100 = vector.extract_strided_slice %79 {offsets = [0, 0], sizes = [2, 32], strides = [1, 1]} : vector<2x128xf32> to vector<2x32xf32>
    %101 = arith.negf %100 : vector<2x32xf32>
    %102 = math.exp %101 : vector<2x32xf32>
    %cst_24 = arith.constant 1.000000e+00 : f32
    %103 = vector.broadcast %cst_24 : f32 to vector<2x32xf32>
    %104 = arith.addf %103, %102 : vector<2x32xf32>
    %105 = arith.divf %103, %104 : vector<2x32xf32>
    %106 = vector.extract_strided_slice %79 {offsets = [0, 32], sizes = [2, 32], strides = [1, 1]} : vector<2x128xf32> to vector<2x32xf32>
    %107 = arith.negf %106 : vector<2x32xf32>
    %108 = math.exp %107 : vector<2x32xf32>
    %cst_25 = arith.constant 1.000000e+00 : f32
    %109 = vector.broadcast %cst_25 : f32 to vector<2x32xf32>
    %110 = arith.addf %109, %108 : vector<2x32xf32>
    %111 = arith.divf %109, %110 : vector<2x32xf32>
    %112 = vector.extract_strided_slice %79 {offsets = [0, 64], sizes = [2, 32], strides = [1, 1]} : vector<2x128xf32> to vector<2x32xf32>
    %113 = math.tanh %112 : vector<2x32xf32>
    %114 = vector.extract_strided_slice %79 {offsets = [0, 96], sizes = [2, 32], strides = [1, 1]} : vector<2x128xf32> to vector<2x32xf32>
    %115 = arith.negf %114 : vector<2x32xf32>
    %116 = math.exp %115 : vector<2x32xf32>
    %cst_26 = arith.constant 1.000000e+00 : f32
    %117 = vector.broadcast %cst_26 : f32 to vector<2x32xf32>
    %118 = arith.addf %117, %116 : vector<2x32xf32>
    %119 = arith.divf %117, %118 : vector<2x32xf32>
    %120 = vector.extract_strided_slice %69 {offsets = [0, 0], sizes = [2, 32], strides = [1, 1]} : vector<2x64xf32> to vector<2x32xf32>
    %121 = arith.mulf %91, %120 : vector<2x32xf32>
    %122 = arith.mulf %85, %93 : vector<2x32xf32>
    %123 = arith.addf %121, %122 : vector<2x32xf32>
    %124 = vector.extract_strided_slice %69 {offsets = [0, 32], sizes = [2, 32], strides = [1, 1]} : vector<2x64xf32> to vector<2x32xf32>
    %125 = arith.mulf %111, %124 : vector<2x32xf32>
    %126 = arith.mulf %105, %113 : vector<2x32xf32>
    %127 = arith.addf %125, %126 : vector<2x32xf32>
    %128 = math.tanh %123 : vector<2x32xf32>
    %129 = arith.mulf %99, %128 : vector<2x32xf32>
    %130 = math.tanh %127 : vector<2x32xf32>
    %131 = arith.mulf %119, %130 : vector<2x32xf32>
    %132 = tpu.concatenate %129, %131 in 1 : vector<2x32xf32>, vector<2x32xf32> -> vector<2x64xf32>
    %133 = tpu.concatenate %123, %127 in 1 : vector<2x32xf32>, vector<2x32xf32> -> vector<2x64xf32>
    %c2 = arith.constant 2 : index
    %c0_27 = arith.constant 0 : index
    %134 = vector.load %arg7[%c2, %c0_27] : memref<16x64xf32, #tpu.memory_space<vmem>>, vector<2x32xf32>
    tpu.vector_store %arg7[%c2, %c0_27], %129 {strides = array<i32>} : memref<16x64xf32, #tpu.memory_space<vmem>>, vector<2x32xf32>,
    %c12 = arith.constant 12 : index
    %c32_28 = arith.constant 32 : index
    %135 = vector.load %arg7[%c12, %c32_28] : memref<16x64xf32, #tpu.memory_space<vmem>>, vector<2x32xf32>
    tpu.vector_store %arg7[%c12, %c32_28], %131 {strides = array<i32>} : memref<16x64xf32, #tpu.memory_space<vmem>>, vector<2x32xf32>,
    %c0_29 = arith.constant 0 : index
    %c0_30 = arith.constant 0 : index
    %136 = vector.load %arg2[%c0_29, %c0_30] : memref<64x256xf32, #tpu.memory_space<vmem>>, vector<64x256xf32>
    %cst_31 = arith.constant dense<0.000000e+00> : vector<2x256xf32>
    %137 = tpu.matmul %132, %136, %cst_31 {dimension_numbers = #tpu.dot_dimension_numbers<[1], [0], [0], [1], [0, 0, 1, 1], [], []>} : vector<2x64xf32>, vector<64x256xf32>, vector<2x256xf32> -> vector<2x256xf32>
    %138 = vector.extract_strided_slice %5 {offsets = [4, 0], sizes = [2, 128], strides = [1, 1]} : vector<16x256xf32> to vector<2x128xf32>
    %139 = vector.extract_strided_slice %137 {offsets = [0, 0], sizes = [2, 128], strides = [1, 1]} : vector<2x256xf32> to vector<2x128xf32>
    %140 = arith.addf %138, %139 : vector<2x128xf32>
    %141 = vector.extract_strided_slice %5 {offsets = [10, 128], sizes = [2, 128], strides = [1, 1]} : vector<16x256xf32> to vector<2x128xf32>
    %142 = vector.extract_strided_slice %137 {offsets = [0, 128], sizes = [2, 128], strides = [1, 1]} : vector<2x256xf32> to vector<2x128xf32>
    %143 = arith.addf %141, %142 : vector<2x128xf32>
    %144 = vector.extract_strided_slice %140 {offsets = [0, 0], sizes = [2, 32], strides = [1, 1]} : vector<2x128xf32> to vector<2x32xf32>
    %145 = arith.negf %144 : vector<2x32xf32>
    %146 = math.exp %145 : vector<2x32xf32>
    %cst_32 = arith.constant 1.000000e+00 : f32
    %147 = vector.broadcast %cst_32 : f32 to vector<2x32xf32>
    %148 = arith.addf %147, %146 : vector<2x32xf32>
    %149 = arith.divf %147, %148 : vector<2x32xf32>
    %150 = vector.extract_strided_slice %140 {offsets = [0, 32], sizes = [2, 32], strides = [1, 1]} : vector<2x128xf32> to vector<2x32xf32>
    %151 = arith.negf %150 : vector<2x32xf32>
    %152 = math.exp %151 : vector<2x32xf32>
    %cst_33 = arith.constant 1.000000e+00 : f32
    %153 = vector.broadcast %cst_33 : f32 to vector<2x32xf32>
    %154 = arith.addf %153, %152 : vector<2x32xf32>
    %155 = arith.divf %153, %154 : vector<2x32xf32>
    %156 = vector.extract_strided_slice %140 {offsets = [0, 64], sizes = [2, 32], strides = [1, 1]} : vector<2x128xf32> to vector<2x32xf32>
    %157 = math.tanh %156 : vector<2x32xf32>
    %158 = vector.extract_strided_slice %140 {offsets = [0, 96], sizes = [2, 32], strides = [1, 1]} : vector<2x128xf32> to vector<2x32xf32>
    %159 = arith.negf %158 : vector<2x32xf32>
    %160 = math.exp %159 : vector<2x32xf32>
    %cst_34 = arith.constant 1.000000e+00 : f32
    %161 = vector.broadcast %cst_34 : f32 to vector<2x32xf32>
    %162 = arith.addf %161, %160 : vector<2x32xf32>
    %163 = arith.divf %161, %162 : vector<2x32xf32>
    %164 = vector.extract_strided_slice %143 {offsets = [0, 0], sizes = [2, 32], strides = [1, 1]} : vector<2x128xf32> to vector<2x32xf32>
    %165 = arith.negf %164 : vector<2x32xf32>
    %166 = math.exp %165 : vector<2x32xf32>
    %cst_35 = arith.constant 1.000000e+00 : f32
    %167 = vector.broadcast %cst_35 : f32 to vector<2x32xf32>
    %168 = arith.addf %167, %166 : vector<2x32xf32>
    %169 = arith.divf %167, %168 : vector<2x32xf32>
    %170 = vector.extract_strided_slice %143 {offsets = [0, 32], sizes = [2, 32], strides = [1, 1]} : vector<2x128xf32> to vector<2x32xf32>
    %171 = arith.negf %170 : vector<2x32xf32>
    %172 = math.exp %171 : vector<2x32xf32>
    %cst_36 = arith.constant 1.000000e+00 : f32
    %173 = vector.broadcast %cst_36 : f32 to vector<2x32xf32>
    %174 = arith.addf %173, %172 : vector<2x32xf32>
    %175 = arith.divf %173, %174 : vector<2x32xf32>
    %176 = vector.extract_strided_slice %143 {offsets = [0, 64], sizes = [2, 32], strides = [1, 1]} : vector<2x128xf32> to vector<2x32xf32>
    %177 = math.tanh %176 : vector<2x32xf32>
    %178 = vector.extract_strided_slice %143 {offsets = [0, 96], sizes = [2, 32], strides = [1, 1]} : vector<2x128xf32> to vector<2x32xf32>
    %179 = arith.negf %178 : vector<2x32xf32>
    %180 = math.exp %179 : vector<2x32xf32>
    %cst_37 = arith.constant 1.000000e+00 : f32
    %181 = vector.broadcast %cst_37 : f32 to vector<2x32xf32>
    %182 = arith.addf %181, %180 : vector<2x32xf32>
    %183 = arith.divf %181, %182 : vector<2x32xf32>
    %184 = vector.extract_strided_slice %133 {offsets = [0, 0], sizes = [2, 32], strides = [1, 1]} : vector<2x64xf32> to vector<2x32xf32>
    %185 = arith.mulf %155, %184 : vector<2x32xf32>
    %186 = arith.mulf %149, %157 : vector<2x32xf32>
    %187 = arith.addf %185, %186 : vector<2x32xf32>
    %188 = vector.extract_strided_slice %133 {offsets = [0, 32], sizes = [2, 32], strides = [1, 1]} : vector<2x64xf32> to vector<2x32xf32>
    %189 = arith.mulf %175, %188 : vector<2x32xf32>
    %190 = arith.mulf %169, %177 : vector<2x32xf32>
    %191 = arith.addf %189, %190 : vector<2x32xf32>
    %192 = math.tanh %187 : vector<2x32xf32>
    %193 = arith.mulf %163, %192 : vector<2x32xf32>
    %194 = math.tanh %191 : vector<2x32xf32>
    %195 = arith.mulf %183, %194 : vector<2x32xf32>
    %196 = tpu.concatenate %193, %195 in 1 : vector<2x32xf32>, vector<2x32xf32> -> vector<2x64xf32>
    %197 = tpu.concatenate %187, %191 in 1 : vector<2x32xf32>, vector<2x32xf32> -> vector<2x64xf32>
    %c4 = arith.constant 4 : index
    %c0_38 = arith.constant 0 : index
    %198 = vector.load %arg7[%c4, %c0_38] : memref<16x64xf32, #tpu.memory_space<vmem>>, vector<2x32xf32>
    tpu.vector_store %arg7[%c4, %c0_38], %193 {strides = array<i32>} : memref<16x64xf32, #tpu.memory_space<vmem>>, vector<2x32xf32>,
    %c10 = arith.constant 10 : index
    %c32_39 = arith.constant 32 : index
    %199 = vector.load %arg7[%c10, %c32_39] : memref<16x64xf32, #tpu.memory_space<vmem>>, vector<2x32xf32>
    tpu.vector_store %arg7[%c10, %c32_39], %195 {strides = array<i32>} : memref<16x64xf32, #tpu.memory_space<vmem>>, vector<2x32xf32>,
    %c0_40 = arith.constant 0 : index
    %c0_41 = arith.constant 0 : index
    %200 = vector.load %arg2[%c0_40, %c0_41] : memref<64x256xf32, #tpu.memory_space<vmem>>, vector<64x256xf32>
    %cst_42 = arith.constant dense<0.000000e+00> : vector<2x256xf32>
    %201 = tpu.matmul %196, %200, %cst_42 {dimension_numbers = #tpu.dot_dimension_numbers<[1], [0], [0], [1], [0, 0, 1, 1], [], []>} : vector<2x64xf32>, vector<64x256xf32>, vector<2x256xf32> -> vector<2x256xf32>
    %202 = vector.extract_strided_slice %5 {offsets = [6, 0], sizes = [2, 128], strides = [1, 1]} : vector<16x256xf32> to vector<2x128xf32>
    %203 = vector.extract_strided_slice %201 {offsets = [0, 0], sizes = [2, 128], strides = [1, 1]} : vector<2x256xf32> to vector<2x128xf32>
    %204 = arith.addf %202, %203 : vector<2x128xf32>
    %205 = vector.extract_strided_slice %5 {offsets = [8, 128], sizes = [2, 128], strides = [1, 1]} : vector<16x256xf32> to vector<2x128xf32>
    %206 = vector.extract_strided_slice %201 {offsets = [0, 128], sizes = [2, 128], strides = [1, 1]} : vector<2x256xf32> to vector<2x128xf32>
    %207 = arith.addf %205, %206 : vector<2x128xf32>
    %208 = vector.extract_strided_slice %204 {offsets = [0, 0], sizes = [2, 32], strides = [1, 1]} : vector<2x128xf32> to vector<2x32xf32>
    %209 = arith.negf %208 : vector<2x32xf32>
    %210 = math.exp %209 : vector<2x32xf32>
    %cst_43 = arith.constant 1.000000e+00 : f32
    %211 = vector.broadcast %cst_43 : f32 to vector<2x32xf32>
    %212 = arith.addf %211, %210 : vector<2x32xf32>
    %213 = arith.divf %211, %212 : vector<2x32xf32>
    %214 = vector.extract_strided_slice %204 {offsets = [0, 32], sizes = [2, 32], strides = [1, 1]} : vector<2x128xf32> to vector<2x32xf32>
    %215 = arith.negf %214 : vector<2x32xf32>
    %216 = math.exp %215 : vector<2x32xf32>
    %cst_44 = arith.constant 1.000000e+00 : f32
    %217 = vector.broadcast %cst_44 : f32 to vector<2x32xf32>
    %218 = arith.addf %217, %216 : vector<2x32xf32>
    %219 = arith.divf %217, %218 : vector<2x32xf32>
    %220 = vector.extract_strided_slice %204 {offsets = [0, 64], sizes = [2, 32], strides = [1, 1]} : vector<2x128xf32> to vector<2x32xf32>
    %221 = math.tanh %220 : vector<2x32xf32>
    %222 = vector.extract_strided_slice %204 {offsets = [0, 96], sizes = [2, 32], strides = [1, 1]} : vector<2x128xf32> to vector<2x32xf32>
    %223 = arith.negf %222 : vector<2x32xf32>
    %224 = math.exp %223 : vector<2x32xf32>
    %cst_45 = arith.constant 1.000000e+00 : f32
    %225 = vector.broadcast %cst_45 : f32 to vector<2x32xf32>
    %226 = arith.addf %225, %224 : vector<2x32xf32>
    %227 = arith.divf %225, %226 : vector<2x32xf32>
    %228 = vector.extract_strided_slice %207 {offsets = [0, 0], sizes = [2, 32], strides = [1, 1]} : vector<2x128xf32> to vector<2x32xf32>
    %229 = arith.negf %228 : vector<2x32xf32>
    %230 = math.exp %229 : vector<2x32xf32>
    %cst_46 = arith.constant 1.000000e+00 : f32
    %231 = vector.broadcast %cst_46 : f32 to vector<2x32xf32>
    %232 = arith.addf %231, %230 : vector<2x32xf32>
    %233 = arith.divf %231, %232 : vector<2x32xf32>
    %234 = vector.extract_strided_slice %207 {offsets = [0, 32], sizes = [2, 32], strides = [1, 1]} : vector<2x128xf32> to vector<2x32xf32>
    %235 = arith.negf %234 : vector<2x32xf32>
    %236 = math.exp %235 : vector<2x32xf32>
    %cst_47 = arith.constant 1.000000e+00 : f32
    %237 = vector.broadcast %cst_47 : f32 to vector<2x32xf32>
    %238 = arith.addf %237, %236 : vector<2x32xf32>
    %239 = arith.divf %237, %238 : vector<2x32xf32>
    %240 = vector.extract_strided_slice %207 {offsets = [0, 64], sizes = [2, 32], strides = [1, 1]} : vector<2x128xf32> to vector<2x32xf32>
    %241 = math.tanh %240 : vector<2x32xf32>
    %242 = vector.extract_strided_slice %207 {offsets = [0, 96], sizes = [2, 32], strides = [1, 1]} : vector<2x128xf32> to vector<2x32xf32>
    %243 = arith.negf %242 : vector<2x32xf32>
    %244 = math.exp %243 : vector<2x32xf32>
    %cst_48 = arith.constant 1.000000e+00 : f32
    %245 = vector.broadcast %cst_48 : f32 to vector<2x32xf32>
    %246 = arith.addf %245, %244 : vector<2x32xf32>
    %247 = arith.divf %245, %246 : vector<2x32xf32>
    %248 = vector.extract_strided_slice %197 {offsets = [0, 0], sizes = [2, 32], strides = [1, 1]} : vector<2x64xf32> to vector<2x32xf32>
    %249 = arith.mulf %219, %248 : vector<2x32xf32>
    %250 = arith.mulf %213, %221 : vector<2x32xf32>
    %251 = arith.addf %249, %250 : vector<2x32xf32>
    %252 = vector.extract_strided_slice %197 {offsets = [0, 32], sizes = [2, 32], strides = [1, 1]} : vector<2x64xf32> to vector<2x32xf32>
    %253 = arith.mulf %239, %252 : vector<2x32xf32>
    %254 = arith.mulf %233, %241 : vector<2x32xf32>
    %255 = arith.addf %253, %254 : vector<2x32xf32>
    %256 = math.tanh %251 : vector<2x32xf32>
    %257 = arith.mulf %227, %256 : vector<2x32xf32>
    %258 = math.tanh %255 : vector<2x32xf32>
    %259 = arith.mulf %247, %258 : vector<2x32xf32>
    %260 = tpu.concatenate %257, %259 in 1 : vector<2x32xf32>, vector<2x32xf32> -> vector<2x64xf32>
    %261 = tpu.concatenate %251, %255 in 1 : vector<2x32xf32>, vector<2x32xf32> -> vector<2x64xf32>
    %c6 = arith.constant 6 : index
    %c0_49 = arith.constant 0 : index
    %262 = vector.load %arg7[%c6, %c0_49] : memref<16x64xf32, #tpu.memory_space<vmem>>, vector<2x32xf32>
    tpu.vector_store %arg7[%c6, %c0_49], %257 {strides = array<i32>} : memref<16x64xf32, #tpu.memory_space<vmem>>, vector<2x32xf32>,
    %c8 = arith.constant 8 : index
    %c32_50 = arith.constant 32 : index
    %263 = vector.load %arg7[%c8, %c32_50] : memref<16x64xf32, #tpu.memory_space<vmem>>, vector<2x32xf32>
    tpu.vector_store %arg7[%c8, %c32_50], %259 {strides = array<i32>} : memref<16x64xf32, #tpu.memory_space<vmem>>, vector<2x32xf32>,
    %c0_51 = arith.constant 0 : index
    %c0_52 = arith.constant 0 : index
    %264 = vector.load %arg2[%c0_51, %c0_52] : memref<64x256xf32, #tpu.memory_space<vmem>>, vector<64x256xf32>
    %cst_53 = arith.constant dense<0.000000e+00> : vector<2x256xf32>
    %265 = tpu.matmul %260, %264, %cst_53 {dimension_numbers = #tpu.dot_dimension_numbers<[1], [0], [0], [1], [0, 0, 1, 1], [], []>} : vector<2x64xf32>, vector<64x256xf32>, vector<2x256xf32> -> vector<2x256xf32>
    %266 = vector.extract_strided_slice %5 {offsets = [8, 0], sizes = [2, 128], strides = [1, 1]} : vector<16x256xf32> to vector<2x128xf32>
    %267 = vector.extract_strided_slice %265 {offsets = [0, 0], sizes = [2, 128], strides = [1, 1]} : vector<2x256xf32> to vector<2x128xf32>
    %268 = arith.addf %266, %267 : vector<2x128xf32>
    %269 = vector.extract_strided_slice %5 {offsets = [6, 128], sizes = [2, 128], strides = [1, 1]} : vector<16x256xf32> to vector<2x128xf32>
    %270 = vector.extract_strided_slice %265 {offsets = [0, 128], sizes = [2, 128], strides = [1, 1]} : vector<2x256xf32> to vector<2x128xf32>
    %271 = arith.addf %269, %270 : vector<2x128xf32>
    %272 = vector.extract_strided_slice %268 {offsets = [0, 0], sizes = [2, 32], strides = [1, 1]} : vector<2x128xf32> to vector<2x32xf32>
    %273 = arith.negf %272 : vector<2x32xf32>
    %274 = math.exp %273 : vector<2x32xf32>
    %cst_54 = arith.constant 1.000000e+00 : f32
    %275 = vector.broadcast %cst_54 : f32 to vector<2x32xf32>
    %276 = arith.addf %275, %274 : vector<2x32xf32>
    %277 = arith.divf %275, %276 : vector<2x32xf32>
    %278 = vector.extract_strided_slice %268 {offsets = [0, 32], sizes = [2, 32], strides = [1, 1]} : vector<2x128xf32> to vector<2x32xf32>
    %279 = arith.negf %278 : vector<2x32xf32>
    %280 = math.exp %279 : vector<2x32xf32>
    %cst_55 = arith.constant 1.000000e+00 : f32
    %281 = vector.broadcast %cst_55 : f32 to vector<2x32xf32>
    %282 = arith.addf %281, %280 : vector<2x32xf32>
    %283 = arith.divf %281, %282 : vector<2x32xf32>
    %284 = vector.extract_strided_slice %268 {offsets = [0, 64], sizes = [2, 32], strides = [1, 1]} : vector<2x128xf32> to vector<2x32xf32>
    %285 = math.tanh %284 : vector<2x32xf32>
    %286 = vector.extract_strided_slice %268 {offsets = [0, 96], sizes = [2, 32], strides = [1, 1]} : vector<2x128xf32> to vector<2x32xf32>
    %287 = arith.negf %286 : vector<2x32xf32>
    %288 = math.exp %287 : vector<2x32xf32>
    %cst_56 = arith.constant 1.000000e+00 : f32
    %289 = vector.broadcast %cst_56 : f32 to vector<2x32xf32>
    %290 = arith.addf %289, %288 : vector<2x32xf32>
    %291 = arith.divf %289, %290 : vector<2x32xf32>
    %292 = vector.extract_strided_slice %271 {offsets = [0, 0], sizes = [2, 32], strides = [1, 1]} : vector<2x128xf32> to vector<2x32xf32>
    %293 = arith.negf %292 : vector<2x32xf32>
    %294 = math.exp %293 : vector<2x32xf32>
    %cst_57 = arith.constant 1.000000e+00 : f32
    %295 = vector.broadcast %cst_57 : f32 to vector<2x32xf32>
    %296 = arith.addf %295, %294 : vector<2x32xf32>
    %297 = arith.divf %295, %296 : vector<2x32xf32>
    %298 = vector.extract_strided_slice %271 {offsets = [0, 32], sizes = [2, 32], strides = [1, 1]} : vector<2x128xf32> to vector<2x32xf32>
    %299 = arith.negf %298 : vector<2x32xf32>
    %300 = math.exp %299 : vector<2x32xf32>
    %cst_58 = arith.constant 1.000000e+00 : f32
    %301 = vector.broadcast %cst_58 : f32 to vector<2x32xf32>
    %302 = arith.addf %301, %300 : vector<2x32xf32>
    %303 = arith.divf %301, %302 : vector<2x32xf32>
    %304 = vector.extract_strided_slice %271 {offsets = [0, 64], sizes = [2, 32], strides = [1, 1]} : vector<2x128xf32> to vector<2x32xf32>
    %305 = math.tanh %304 : vector<2x32xf32>
    %306 = vector.extract_strided_slice %271 {offsets = [0, 96], sizes = [2, 32], strides = [1, 1]} : vector<2x128xf32> to vector<2x32xf32>
    %307 = arith.negf %306 : vector<2x32xf32>
    %308 = math.exp %307 : vector<2x32xf32>
    %cst_59 = arith.constant 1.000000e+00 : f32
    %309 = vector.broadcast %cst_59 : f32 to vector<2x32xf32>
    %310 = arith.addf %309, %308 : vector<2x32xf32>
    %311 = arith.divf %309, %310 : vector<2x32xf32>
    %312 = vector.extract_strided_slice %261 {offsets = [0, 0], sizes = [2, 32], strides = [1, 1]} : vector<2x64xf32> to vector<2x32xf32>
    %313 = arith.mulf %283, %312 : vector<2x32xf32>
    %314 = arith.mulf %277, %285 : vector<2x32xf32>
    %315 = arith.addf %313, %314 : vector<2x32xf32>
    %316 = vector.extract_strided_slice %261 {offsets = [0, 32], sizes = [2, 32], strides = [1, 1]} : vector<2x64xf32> to vector<2x32xf32>
    %317 = arith.mulf %303, %316 : vector<2x32xf32>
    %318 = arith.mulf %297, %305 : vector<2x32xf32>
    %319 = arith.addf %317, %318 : vector<2x32xf32>
    %320 = math.tanh %315 : vector<2x32xf32>
    %321 = arith.mulf %291, %320 : vector<2x32xf32>
    %322 = math.tanh %319 : vector<2x32xf32>
    %323 = arith.mulf %311, %322 : vector<2x32xf32>
    %324 = tpu.concatenate %321, %323 in 1 : vector<2x32xf32>, vector<2x32xf32> -> vector<2x64xf32>
    %325 = tpu.concatenate %315, %319 in 1 : vector<2x32xf32>, vector<2x32xf32> -> vector<2x64xf32>
    %c8_60 = arith.constant 8 : index
    %c0_61 = arith.constant 0 : index
    %326 = vector.load %arg7[%c8_60, %c0_61] : memref<16x64xf32, #tpu.memory_space<vmem>>, vector<2x32xf32>
    tpu.vector_store %arg7[%c8_60, %c0_61], %321 {strides = array<i32>} : memref<16x64xf32, #tpu.memory_space<vmem>>, vector<2x32xf32>,
    %c6_62 = arith.constant 6 : index
    %c32_63 = arith.constant 32 : index
    %327 = vector.load %arg7[%c6_62, %c32_63] : memref<16x64xf32, #tpu.memory_space<vmem>>, vector<2x32xf32>
    tpu.vector_store %arg7[%c6_62, %c32_63], %323 {strides = array<i32>} : memref<16x64xf32, #tpu.memory_space<vmem>>, vector<2x32xf32>,
    %c0_64 = arith.constant 0 : index
    %c0_65 = arith.constant 0 : index
    %328 = vector.load %arg2[%c0_64, %c0_65] : memref<64x256xf32, #tpu.memory_space<vmem>>, vector<64x256xf32>
    %cst_66 = arith.constant dense<0.000000e+00> : vector<2x256xf32>
    %329 = tpu.matmul %324, %328, %cst_66 {dimension_numbers = #tpu.dot_dimension_numbers<[1], [0], [0], [1], [0, 0, 1, 1], [], []>} : vector<2x64xf32>, vector<64x256xf32>, vector<2x256xf32> -> vector<2x256xf32>
    %330 = vector.extract_strided_slice %5 {offsets = [10, 0], sizes = [2, 128], strides = [1, 1]} : vector<16x256xf32> to vector<2x128xf32>
    %331 = vector.extract_strided_slice %329 {offsets = [0, 0], sizes = [2, 128], strides = [1, 1]} : vector<2x256xf32> to vector<2x128xf32>
    %332 = arith.addf %330, %331 : vector<2x128xf32>
    %333 = vector.extract_strided_slice %5 {offsets = [4, 128], sizes = [2, 128], strides = [1, 1]} : vector<16x256xf32> to vector<2x128xf32>
    %334 = vector.extract_strided_slice %329 {offsets = [0, 128], sizes = [2, 128], strides = [1, 1]} : vector<2x256xf32> to vector<2x128xf32>
    %335 = arith.addf %333, %334 : vector<2x128xf32>
    %336 = vector.extract_strided_slice %332 {offsets = [0, 0], sizes = [2, 32], strides = [1, 1]} : vector<2x128xf32> to vector<2x32xf32>
    %337 = arith.negf %336 : vector<2x32xf32>
    %338 = math.exp %337 : vector<2x32xf32>
    %cst_67 = arith.constant 1.000000e+00 : f32
    %339 = vector.broadcast %cst_67 : f32 to vector<2x32xf32>
    %340 = arith.addf %339, %338 : vector<2x32xf32>
    %341 = arith.divf %339, %340 : vector<2x32xf32>
    %342 = vector.extract_strided_slice %332 {offsets = [0, 32], sizes = [2, 32], strides = [1, 1]} : vector<2x128xf32> to vector<2x32xf32>
    %343 = arith.negf %342 : vector<2x32xf32>
    %344 = math.exp %343 : vector<2x32xf32>
    %cst_68 = arith.constant 1.000000e+00 : f32
    %345 = vector.broadcast %cst_68 : f32 to vector<2x32xf32>
    %346 = arith.addf %345, %344 : vector<2x32xf32>
    %347 = arith.divf %345, %346 : vector<2x32xf32>
    %348 = vector.extract_strided_slice %332 {offsets = [0, 64], sizes = [2, 32], strides = [1, 1]} : vector<2x128xf32> to vector<2x32xf32>
    %349 = math.tanh %348 : vector<2x32xf32>
    %350 = vector.extract_strided_slice %332 {offsets = [0, 96], sizes = [2, 32], strides = [1, 1]} : vector<2x128xf32> to vector<2x32xf32>
    %351 = arith.negf %350 : vector<2x32xf32>
    %352 = math.exp %351 : vector<2x32xf32>
    %cst_69 = arith.constant 1.000000e+00 : f32
    %353 = vector.broadcast %cst_69 : f32 to vector<2x32xf32>
    %354 = arith.addf %353, %352 : vector<2x32xf32>
    %355 = arith.divf %353, %354 : vector<2x32xf32>
    %356 = vector.extract_strided_slice %335 {offsets = [0, 0], sizes = [2, 32], strides = [1, 1]} : vector<2x128xf32> to vector<2x32xf32>
    %357 = arith.negf %356 : vector<2x32xf32>
    %358 = math.exp %357 : vector<2x32xf32>
    %cst_70 = arith.constant 1.000000e+00 : f32
    %359 = vector.broadcast %cst_70 : f32 to vector<2x32xf32>
    %360 = arith.addf %359, %358 : vector<2x32xf32>
    %361 = arith.divf %359, %360 : vector<2x32xf32>
    %362 = vector.extract_strided_slice %335 {offsets = [0, 32], sizes = [2, 32], strides = [1, 1]} : vector<2x128xf32> to vector<2x32xf32>
    %363 = arith.negf %362 : vector<2x32xf32>
    %364 = math.exp %363 : vector<2x32xf32>
    %cst_71 = arith.constant 1.000000e+00 : f32
    %365 = vector.broadcast %cst_71 : f32 to vector<2x32xf32>
    %366 = arith.addf %365, %364 : vector<2x32xf32>
    %367 = arith.divf %365, %366 : vector<2x32xf32>
    %368 = vector.extract_strided_slice %335 {offsets = [0, 64], sizes = [2, 32], strides = [1, 1]} : vector<2x128xf32> to vector<2x32xf32>
    %369 = math.tanh %368 : vector<2x32xf32>
    %370 = vector.extract_strided_slice %335 {offsets = [0, 96], sizes = [2, 32], strides = [1, 1]} : vector<2x128xf32> to vector<2x32xf32>
    %371 = arith.negf %370 : vector<2x32xf32>
    %372 = math.exp %371 : vector<2x32xf32>
    %cst_72 = arith.constant 1.000000e+00 : f32
    %373 = vector.broadcast %cst_72 : f32 to vector<2x32xf32>
    %374 = arith.addf %373, %372 : vector<2x32xf32>
    %375 = arith.divf %373, %374 : vector<2x32xf32>
    %376 = vector.extract_strided_slice %325 {offsets = [0, 0], sizes = [2, 32], strides = [1, 1]} : vector<2x64xf32> to vector<2x32xf32>
    %377 = arith.mulf %347, %376 : vector<2x32xf32>
    %378 = arith.mulf %341, %349 : vector<2x32xf32>
    %379 = arith.addf %377, %378 : vector<2x32xf32>
    %380 = vector.extract_strided_slice %325 {offsets = [0, 32], sizes = [2, 32], strides = [1, 1]} : vector<2x64xf32> to vector<2x32xf32>
    %381 = arith.mulf %367, %380 : vector<2x32xf32>
    %382 = arith.mulf %361, %369 : vector<2x32xf32>
    %383 = arith.addf %381, %382 : vector<2x32xf32>
    %384 = math.tanh %379 : vector<2x32xf32>
    %385 = arith.mulf %355, %384 : vector<2x32xf32>
    %386 = math.tanh %383 : vector<2x32xf32>
    %387 = arith.mulf %375, %386 : vector<2x32xf32>
    %388 = tpu.concatenate %385, %387 in 1 : vector<2x32xf32>, vector<2x32xf32> -> vector<2x64xf32>
    %389 = tpu.concatenate %379, %383 in 1 : vector<2x32xf32>, vector<2x32xf32> -> vector<2x64xf32>
    %c10_73 = arith.constant 10 : index
    %c0_74 = arith.constant 0 : index
    %390 = vector.load %arg7[%c10_73, %c0_74] : memref<16x64xf32, #tpu.memory_space<vmem>>, vector<2x32xf32>
    tpu.vector_store %arg7[%c10_73, %c0_74], %385 {strides = array<i32>} : memref<16x64xf32, #tpu.memory_space<vmem>>, vector<2x32xf32>,
    %c4_75 = arith.constant 4 : index
    %c32_76 = arith.constant 32 : index
    %391 = vector.load %arg7[%c4_75, %c32_76] : memref<16x64xf32, #tpu.memory_space<vmem>>, vector<2x32xf32>
    tpu.vector_store %arg7[%c4_75, %c32_76], %387 {strides = array<i32>} : memref<16x64xf32, #tpu.memory_space<vmem>>, vector<2x32xf32>,
    %c0_77 = arith.constant 0 : index
    %c0_78 = arith.constant 0 : index
    %392 = vector.load %arg2[%c0_77, %c0_78] : memref<64x256xf32, #tpu.memory_space<vmem>>, vector<64x256xf32>
    %cst_79 = arith.constant dense<0.000000e+00> : vector<2x256xf32>
    %393 = tpu.matmul %388, %392, %cst_79 {dimension_numbers = #tpu.dot_dimension_numbers<[1], [0], [0], [1], [0, 0, 1, 1], [], []>} : vector<2x64xf32>, vector<64x256xf32>, vector<2x256xf32> -> vector<2x256xf32>
    %394 = vector.extract_strided_slice %5 {offsets = [12, 0], sizes = [2, 128], strides = [1, 1]} : vector<16x256xf32> to vector<2x128xf32>
    %395 = vector.extract_strided_slice %393 {offsets = [0, 0], sizes = [2, 128], strides = [1, 1]} : vector<2x256xf32> to vector<2x128xf32>
    %396 = arith.addf %394, %395 : vector<2x128xf32>
    %397 = vector.extract_strided_slice %5 {offsets = [2, 128], sizes = [2, 128], strides = [1, 1]} : vector<16x256xf32> to vector<2x128xf32>
    %398 = vector.extract_strided_slice %393 {offsets = [0, 128], sizes = [2, 128], strides = [1, 1]} : vector<2x256xf32> to vector<2x128xf32>
    %399 = arith.addf %397, %398 : vector<2x128xf32>
    %400 = vector.extract_strided_slice %396 {offsets = [0, 0], sizes = [2, 32], strides = [1, 1]} : vector<2x128xf32> to vector<2x32xf32>
    %401 = arith.negf %400 : vector<2x32xf32>
    %402 = math.exp %401 : vector<2x32xf32>
    %cst_80 = arith.constant 1.000000e+00 : f32
    %403 = vector.broadcast %cst_80 : f32 to vector<2x32xf32>
    %404 = arith.addf %403, %402 : vector<2x32xf32>
    %405 = arith.divf %403, %404 : vector<2x32xf32>
    %406 = vector.extract_strided_slice %396 {offsets = [0, 32], sizes = [2, 32], strides = [1, 1]} : vector<2x128xf32> to vector<2x32xf32>
    %407 = arith.negf %406 : vector<2x32xf32>
    %408 = math.exp %407 : vector<2x32xf32>
    %cst_81 = arith.constant 1.000000e+00 : f32
    %409 = vector.broadcast %cst_81 : f32 to vector<2x32xf32>
    %410 = arith.addf %409, %408 : vector<2x32xf32>
    %411 = arith.divf %409, %410 : vector<2x32xf32>
    %412 = vector.extract_strided_slice %396 {offsets = [0, 64], sizes = [2, 32], strides = [1, 1]} : vector<2x128xf32> to vector<2x32xf32>
    %413 = math.tanh %412 : vector<2x32xf32>
    %414 = vector.extract_strided_slice %396 {offsets = [0, 96], sizes = [2, 32], strides = [1, 1]} : vector<2x128xf32> to vector<2x32xf32>
    %415 = arith.negf %414 : vector<2x32xf32>
    %416 = math.exp %415 : vector<2x32xf32>
    %cst_82 = arith.constant 1.000000e+00 : f32
    %417 = vector.broadcast %cst_82 : f32 to vector<2x32xf32>
    %418 = arith.addf %417, %416 : vector<2x32xf32>
    %419 = arith.divf %417, %418 : vector<2x32xf32>
    %420 = vector.extract_strided_slice %399 {offsets = [0, 0], sizes = [2, 32], strides = [1, 1]} : vector<2x128xf32> to vector<2x32xf32>
    %421 = arith.negf %420 : vector<2x32xf32>
    %422 = math.exp %421 : vector<2x32xf32>
    %cst_83 = arith.constant 1.000000e+00 : f32
    %423 = vector.broadcast %cst_83 : f32 to vector<2x32xf32>
    %424 = arith.addf %423, %422 : vector<2x32xf32>
    %425 = arith.divf %423, %424 : vector<2x32xf32>
    %426 = vector.extract_strided_slice %399 {offsets = [0, 32], sizes = [2, 32], strides = [1, 1]} : vector<2x128xf32> to vector<2x32xf32>
    %427 = arith.negf %426 : vector<2x32xf32>
    %428 = math.exp %427 : vector<2x32xf32>
    %cst_84 = arith.constant 1.000000e+00 : f32
    %429 = vector.broadcast %cst_84 : f32 to vector<2x32xf32>
    %430 = arith.addf %429, %428 : vector<2x32xf32>
    %431 = arith.divf %429, %430 : vector<2x32xf32>
    %432 = vector.extract_strided_slice %399 {offsets = [0, 64], sizes = [2, 32], strides = [1, 1]} : vector<2x128xf32> to vector<2x32xf32>
    %433 = math.tanh %432 : vector<2x32xf32>
    %434 = vector.extract_strided_slice %399 {offsets = [0, 96], sizes = [2, 32], strides = [1, 1]} : vector<2x128xf32> to vector<2x32xf32>
    %435 = arith.negf %434 : vector<2x32xf32>
    %436 = math.exp %435 : vector<2x32xf32>
    %cst_85 = arith.constant 1.000000e+00 : f32
    %437 = vector.broadcast %cst_85 : f32 to vector<2x32xf32>
    %438 = arith.addf %437, %436 : vector<2x32xf32>
    %439 = arith.divf %437, %438 : vector<2x32xf32>
    %440 = vector.extract_strided_slice %389 {offsets = [0, 0], sizes = [2, 32], strides = [1, 1]} : vector<2x64xf32> to vector<2x32xf32>
    %441 = arith.mulf %411, %440 : vector<2x32xf32>
    %442 = arith.mulf %405, %413 : vector<2x32xf32>
    %443 = arith.addf %441, %442 : vector<2x32xf32>
    %444 = vector.extract_strided_slice %389 {offsets = [0, 32], sizes = [2, 32], strides = [1, 1]} : vector<2x64xf32> to vector<2x32xf32>
    %445 = arith.mulf %431, %444 : vector<2x32xf32>
    %446 = arith.mulf %425, %433 : vector<2x32xf32>
    %447 = arith.addf %445, %446 : vector<2x32xf32>
    %448 = math.tanh %443 : vector<2x32xf32>
    %449 = arith.mulf %419, %448 : vector<2x32xf32>
    %450 = math.tanh %447 : vector<2x32xf32>
    %451 = arith.mulf %439, %450 : vector<2x32xf32>
    %452 = tpu.concatenate %449, %451 in 1 : vector<2x32xf32>, vector<2x32xf32> -> vector<2x64xf32>
    %453 = tpu.concatenate %443, %447 in 1 : vector<2x32xf32>, vector<2x32xf32> -> vector<2x64xf32>
    %c12_86 = arith.constant 12 : index
    %c0_87 = arith.constant 0 : index
    %454 = vector.load %arg7[%c12_86, %c0_87] : memref<16x64xf32, #tpu.memory_space<vmem>>, vector<2x32xf32>
    tpu.vector_store %arg7[%c12_86, %c0_87], %449 {strides = array<i32>} : memref<16x64xf32, #tpu.memory_space<vmem>>, vector<2x32xf32>,
    %c2_88 = arith.constant 2 : index
    %c32_89 = arith.constant 32 : index
    %455 = vector.load %arg7[%c2_88, %c32_89] : memref<16x64xf32, #tpu.memory_space<vmem>>, vector<2x32xf32>
    tpu.vector_store %arg7[%c2_88, %c32_89], %451 {strides = array<i32>} : memref<16x64xf32, #tpu.memory_space<vmem>>, vector<2x32xf32>,
    %c0_90 = arith.constant 0 : index
    %c0_91 = arith.constant 0 : index
    %456 = vector.load %arg2[%c0_90, %c0_91] : memref<64x256xf32, #tpu.memory_space<vmem>>, vector<64x256xf32>
    %cst_92 = arith.constant dense<0.000000e+00> : vector<2x256xf32>
    %457 = tpu.matmul %452, %456, %cst_92 {dimension_numbers = #tpu.dot_dimension_numbers<[1], [0], [0], [1], [0, 0, 1, 1], [], []>} : vector<2x64xf32>, vector<64x256xf32>, vector<2x256xf32> -> vector<2x256xf32>
    %458 = vector.extract_strided_slice %5 {offsets = [14, 0], sizes = [2, 128], strides = [1, 1]} : vector<16x256xf32> to vector<2x128xf32>
    %459 = vector.extract_strided_slice %457 {offsets = [0, 0], sizes = [2, 128], strides = [1, 1]} : vector<2x256xf32> to vector<2x128xf32>
    %460 = arith.addf %458, %459 : vector<2x128xf32>
    %461 = vector.extract_strided_slice %5 {offsets = [0, 128], sizes = [2, 128], strides = [1, 1]} : vector<16x256xf32> to vector<2x128xf32>
    %462 = vector.extract_strided_slice %457 {offsets = [0, 128], sizes = [2, 128], strides = [1, 1]} : vector<2x256xf32> to vector<2x128xf32>
    %463 = arith.addf %461, %462 : vector<2x128xf32>
    %464 = vector.extract_strided_slice %460 {offsets = [0, 0], sizes = [2, 32], strides = [1, 1]} : vector<2x128xf32> to vector<2x32xf32>
    %465 = arith.negf %464 : vector<2x32xf32>
    %466 = math.exp %465 : vector<2x32xf32>
    %cst_93 = arith.constant 1.000000e+00 : f32
    %467 = vector.broadcast %cst_93 : f32 to vector<2x32xf32>
    %468 = arith.addf %467, %466 : vector<2x32xf32>
    %469 = arith.divf %467, %468 : vector<2x32xf32>
    %470 = vector.extract_strided_slice %460 {offsets = [0, 32], sizes = [2, 32], strides = [1, 1]} : vector<2x128xf32> to vector<2x32xf32>
    %471 = arith.negf %470 : vector<2x32xf32>
    %472 = math.exp %471 : vector<2x32xf32>
    %cst_94 = arith.constant 1.000000e+00 : f32
    %473 = vector.broadcast %cst_94 : f32 to vector<2x32xf32>
    %474 = arith.addf %473, %472 : vector<2x32xf32>
    %475 = arith.divf %473, %474 : vector<2x32xf32>
    %476 = vector.extract_strided_slice %460 {offsets = [0, 64], sizes = [2, 32], strides = [1, 1]} : vector<2x128xf32> to vector<2x32xf32>
    %477 = math.tanh %476 : vector<2x32xf32>
    %478 = vector.extract_strided_slice %460 {offsets = [0, 96], sizes = [2, 32], strides = [1, 1]} : vector<2x128xf32> to vector<2x32xf32>
    %479 = arith.negf %478 : vector<2x32xf32>
    %480 = math.exp %479 : vector<2x32xf32>
    %cst_95 = arith.constant 1.000000e+00 : f32
    %481 = vector.broadcast %cst_95 : f32 to vector<2x32xf32>
    %482 = arith.addf %481, %480 : vector<2x32xf32>
    %483 = arith.divf %481, %482 : vector<2x32xf32>
    %484 = vector.extract_strided_slice %463 {offsets = [0, 0], sizes = [2, 32], strides = [1, 1]} : vector<2x128xf32> to vector<2x32xf32>
    %485 = arith.negf %484 : vector<2x32xf32>
    %486 = math.exp %485 : vector<2x32xf32>
    %cst_96 = arith.constant 1.000000e+00 : f32
    %487 = vector.broadcast %cst_96 : f32 to vector<2x32xf32>
    %488 = arith.addf %487, %486 : vector<2x32xf32>
    %489 = arith.divf %487, %488 : vector<2x32xf32>
    %490 = vector.extract_strided_slice %463 {offsets = [0, 32], sizes = [2, 32], strides = [1, 1]} : vector<2x128xf32> to vector<2x32xf32>
    %491 = arith.negf %490 : vector<2x32xf32>
    %492 = math.exp %491 : vector<2x32xf32>
    %cst_97 = arith.constant 1.000000e+00 : f32
    %493 = vector.broadcast %cst_97 : f32 to vector<2x32xf32>
    %494 = arith.addf %493, %492 : vector<2x32xf32>
    %495 = arith.divf %493, %494 : vector<2x32xf32>
    %496 = vector.extract_strided_slice %463 {offsets = [0, 64], sizes = [2, 32], strides = [1, 1]} : vector<2x128xf32> to vector<2x32xf32>
    %497 = math.tanh %496 : vector<2x32xf32>
    %498 = vector.extract_strided_slice %463 {offsets = [0, 96], sizes = [2, 32], strides = [1, 1]} : vector<2x128xf32> to vector<2x32xf32>
    %499 = arith.negf %498 : vector<2x32xf32>
    %500 = math.exp %499 : vector<2x32xf32>
    %cst_98 = arith.constant 1.000000e+00 : f32
    %501 = vector.broadcast %cst_98 : f32 to vector<2x32xf32>
    %502 = arith.addf %501, %500 : vector<2x32xf32>
    %503 = arith.divf %501, %502 : vector<2x32xf32>
    %504 = vector.extract_strided_slice %453 {offsets = [0, 0], sizes = [2, 32], strides = [1, 1]} : vector<2x64xf32> to vector<2x32xf32>
    %505 = arith.mulf %475, %504 : vector<2x32xf32>
    %506 = arith.mulf %469, %477 : vector<2x32xf32>
    %507 = arith.addf %505, %506 : vector<2x32xf32>
    %508 = vector.extract_strided_slice %453 {offsets = [0, 32], sizes = [2, 32], strides = [1, 1]} : vector<2x64xf32> to vector<2x32xf32>
    %509 = arith.mulf %495, %508 : vector<2x32xf32>
    %510 = arith.mulf %489, %497 : vector<2x32xf32>
    %511 = arith.addf %509, %510 : vector<2x32xf32>
    %512 = math.tanh %507 : vector<2x32xf32>
    %513 = arith.mulf %483, %512 : vector<2x32xf32>
    %514 = math.tanh %511 : vector<2x32xf32>
    %515 = arith.mulf %503, %514 : vector<2x32xf32>
    %c14_99 = arith.constant 14 : index
    %c0_100 = arith.constant 0 : index
    %516 = vector.load %arg7[%c14_99, %c0_100] : memref<16x64xf32, #tpu.memory_space<vmem>>, vector<2x32xf32>
    tpu.vector_store %arg7[%c14_99, %c0_100], %513 {strides = array<i32>} : memref<16x64xf32, #tpu.memory_space<vmem>>, vector<2x32xf32>,
    %c0_101 = arith.constant 0 : index
    %c32_102 = arith.constant 32 : index
    %517 = vector.load %arg7[%c0_101, %c32_102] : memref<16x64xf32, #tpu.memory_space<vmem>>, vector<2x32xf32>
    tpu.vector_store %arg7[%c0_101, %c32_102], %515 {strides = array<i32>} : memref<16x64xf32, #tpu.memory_space<vmem>>, vector<2x32xf32>,
    %c0_103 = arith.constant 0 : index
    %c0_104 = arith.constant 0 : index
    %518 = vector.load %arg7[%c0_103, %c0_104] : memref<16x64xf32, #tpu.memory_space<vmem>>, vector<16x64xf32>
    %c0_105 = arith.constant 0 : index
    %c0_106 = arith.constant 0 : index
    %519 = vector.load %arg4[%c0_105, %c0_106] : memref<64x16xf32, #tpu.memory_space<vmem>>, vector<64x16xf32>
    %cst_107 = arith.constant dense<0.000000e+00> : vector<16x16xf32>
    %520 = tpu.matmul %518, %519, %cst_107 {dimension_numbers = #tpu.dot_dimension_numbers<[1], [0], [0], [1], [0, 0, 1, 1], [], []>} : vector<16x64xf32>, vector<64x16xf32>, vector<16x16xf32> -> vector<16x16xf32>
    %c0_108 = arith.constant 0 : index
    %c0_109 = arith.constant 0 : index
    %521 = vector.load %arg5[%c0_108, %c0_109] : memref<1x16xf32, #tpu.memory_space<vmem>>, vector<1x16xf32>
    %522 = vector.broadcast %521 : vector<1x16xf32> to vector<16x16xf32>
    %523 = arith.addf %520, %522 : vector<16x16xf32>
    %c0_110 = arith.constant 0 : index
    %c0_111 = arith.constant 0 : index
    %524 = vector.load %arg6[%c0_110, %c0_111] : memref<16x16xf32, #tpu.memory_space<vmem>>, vector<16x16xf32>
    tpu.vector_store %arg6[%c0_110, %c0_111], %523 {strides = array<i32>} : memref<16x16xf32, #tpu.memory_space<vmem>>, vector<16x16xf32>,
    return
  }
}

</mosaic_0001>

<llo_original>
// kernel: tpu_custom_call.1
$region0: #{tpu_custom_call.1}
  #allocation0 [shape = 'u32[]', space=smem, size = 0x4, offset = 0x4, fixed_abs, tag = 'smem constant byte address 0x4 - core index']
  #allocation1 [shape = 'u32[144,128]{1,0:T(1,128)}', space=vmem, size = 0x12000, scoped, tag = 'internal scratch']
  #allocation2 [shape = 'f32[16,64]{1,0:T(8,128)}', space=vmem, size = 0x2000, scoped, tag = 'scratch operand']
  %s0 = inlined_call_operand.vmem [shape: f32[16,16], index: 0, kind: input, shape index: {}]
  %s1 = inlined_call_operand.vmem [shape: f32[16,256], index: 1, kind: input, shape index: {}]
  %s2 = inlined_call_operand.hbm [shape: f32[64,256], index: 2, kind: input, shape index: {}]
  %s3 = inlined_call_operand.vmem [shape: f32[1,256], index: 3, kind: input, shape index: {}]
  %s4 = inlined_call_operand.vmem [shape: f32[64,16], index: 4, kind: input, shape index: {}]
  %s5 = inlined_call_operand.vmem [shape: f32[1,16], index: 5, kind: input, shape index: {}]
  %s6 = inlined_call_operand.hbm [shape: f32[16,16], index: 6, kind: output, shape index: {}]
  %s7 = sld [smem:[#allocation0]]
  $region38: #{tpu_custom_call.1} parent=0
    _
  %s9 = ssub.s32 1, %s7
  %s10 = scalar_select 0, %s9, %s7
  $region1: #{tpu_custom_call.1} parent=0
    #allocation3 [shape = 'u8[65536]{0}', space=vmem, size = 0x10000, scoped, tag = 'input window, operand 2, single buffered']
    #allocation4 [shape = 's32[1]{0}', space=sflag, size = 0x4, scoped, tag = 'scoped memory for tpu_custom_call.1']
    #allocation5 [shape = 's32[1]{0}', space=sflag, size = 0x4, scoped, tag = 'scoped memory for tpu_custom_call.1']
    #allocation6 [shape = 'u8[8192]{0}', space=vmem, size = 0x2000, scoped, tag = 'output window, operand 0, single buffered']
    %11 = vsyncpa [#allocation4], 0
    %12 = vsyncpa [#allocation5], 0
    // Predicated region
    $region2: #{tpu_custom_call.1} parent=1 // pred_check
      _
    $region3: #{tpu_custom_call.1} parent=1 // pred_check_branch
      %14 = sbr.rel (0) target = $region5
    $region4: #{tpu_custom_call.1} parent=1 // pred_region
      _
    $region5: #{tpu_custom_call.1} parent=1 // pred_fallthru
      _
    // Predicated region
    $region6: #{tpu_custom_call.1} parent=1 // pred_check
      _
    $region7: #{tpu_custom_call.1} parent=1 // pred_check_branch
      %16 = sbr.rel (0) target = $region9
    $region8: #{tpu_custom_call.1} parent=1 // pred_region
      _
    $region9: #{tpu_custom_call.1} parent=1 // pred_fallthru
      _
    // Predicated region
    $region10: #{tpu_custom_call.1} parent=1 // pred_check
      _
    $region11: #{tpu_custom_call.1} parent=1 // pred_check_branch
      %18 = sbr.rel (0) target = $region13
    $region12: #{tpu_custom_call.1} parent=1 // pred_region
      %s20 = ssub.s32 2048, 2048
      %21 = vsyncadd [#allocation4], %s20
      %s22 = sshll.u32 [#allocation3], 4
      %s23 = int_to_ptr.vmem [resolvable:$true] %s22
      %28 = dma.hbm_to_vmem [thread:$0]  %s2, 2048, %s23, [#allocation4], 256, 256, 16
    $region13: #{tpu_custom_call.1} parent=1 // pred_fallthru
      _
    // Predicated region
    $region14: #{tpu_custom_call.1} parent=1 // pred_check
      _
    $region15: #{tpu_custom_call.1} parent=1 // pred_check_branch
      %30 = sbr.rel (0) target = $region17
    $region16: #{tpu_custom_call.1} parent=1 // pred_region
      _
    $region17: #{tpu_custom_call.1} parent=1 // pred_fallthru
      _
    // Predicated region
    $region18: #{tpu_custom_call.1} parent=1 // pred_check
      _
    $region19: #{tpu_custom_call.1} parent=1 // pred_check_branch
      %32 = sbr.rel (0) target = $region21
    $region20: #{tpu_custom_call.1} parent=1 // pred_region
      _
    $region21: #{tpu_custom_call.1} parent=1 // pred_fallthru
      _
    // Predicated region
    $region22: #{tpu_custom_call.1} parent=1 // pred_check
      _
    $region23: #{tpu_custom_call.1} parent=1 // pred_check_branch
      %34 = sbr.rel (0) target = $region25
    $region24: #{tpu_custom_call.1} parent=1 // pred_region
      _
    $region25: #{tpu_custom_call.1} parent=1 // pred_fallthru
      _
    // Predicated region
    $region26: #{tpu_custom_call.1} parent=1 // pred_check
      _
    $region27: #{tpu_custom_call.1} parent=1 // pred_check_branch
      %36 = sbr.rel (0) target = $region29
    $region28: #{tpu_custom_call.1} parent=1 // pred_region
      %37 = dma.done [#allocation4], 2048
    $region29: #{tpu_custom_call.1} parent=1 // pred_fallthru
      _
    %v38 = vld [vmem:[%s0] sm:$0xff]
    %v39 = vld [vmem:[%s0 + $0x8] sm:$0xff]
    %v40 = vld [vmem:[%s1] sm:$0xff]
    %v41 = vld [vmem:[%s1 + $0x8] sm:$0xff]
    %v42 = vld [vmem:[%s1 + $0x10] sm:$0xff]
    %v43 = vld [vmem:[%s1 + $0x18] sm:$0xff]
    %v44 = vld [vmem:[%s3] sm:$0x3]
    %v46 = vlaneseq
    %v47 = vshrl.u32 %v46, 7
    %v48 = vsub.s32 0, %v47
    %v49 = vrot.slane %v44, %v48
    %v50 = vlaneseq
    %v51 = vshrl.u32 %v50, 7
    %v52 = vsub.s32 1, %v51
    %v53 = vrot.slane %v44, %v52
    %vm56 = vcmask 130048
    %v58 = vsel %vm56, %v38, 0
    %v61 = vsel %vm56, %v39, 0
    %63 = vmatprep.subr.mxu0 0.0
    %64 = vmatpush1.msra.mxu0 0.0
    %65 = vmatprep.subr.mxu0 0.0
    %66 = vmatpush1.msra.mxu0 0.0
    %67 = vmatprep.subr.mxu0 0.0
    %68 = vmatpush1.msra.mxu0 0.0
    %69 = vmatprep.subr.mxu0 0.0
    %70 = vmatpush1.msra.mxu0 0.0
    %71 = vmatprep.subr.mxu0 0.0
    %72 = vmatpush1.msra.mxu0 0.0
    %73 = vmatprep.subr.mxu0 0.0
    %74 = vmatpush1.msra.mxu0 0.0
    %75 = vmatprep.subr.mxu0 0.0
    %76 = vmatpush1.msra.mxu0 0.0
    %77 = vmatprep.subr.mxu0 0.0
    %78 = vmatpush1.msra.mxu0 0.0
    %79 = vmatprep.subr.mxu0 0.0
    %80 = vmatpush1.msra.mxu0 0.0
    %81 = vmatprep.subr.mxu0 0.0
    %82 = vmatpush1.msra.mxu0 0.0
    %83 = vmatprep.subr.mxu0 0.0
    %84 = vmatpush1.msra.mxu0 0.0
    %85 = vmatprep.subr.mxu0 0.0
    %86 = vmatpush1.msra.mxu0 0.0
    %87 = vmatprep.subr.mxu0 0.0
    %88 = vmatpush1.msra.mxu0 0.0
    %89 = vmatprep.subr.mxu0 0.0
    %90 = vmatpush1.msra.mxu0 0.0
    %91 = vmatprep.subr.mxu0 %v43
    %92 = vmatpush1.msra.mxu0 %v42
    %93 = vmatprep.subr.mxu0 %v41
    %94 = vmatpush1.msra.mxu0 %v40
    %95 = vmatprep.subr.mxu0 0.0
    %96 = vmatpush2.msra.mxu0 0.0
    %97 = vmatprep.subr.mxu0 0.0
    %98 = vmatpush2.msra.mxu0 0.0
    %99 = vmatprep.subr.mxu0 0.0
    %100 = vmatpush2.msra.mxu0 0.0
    %101 = vmatprep.subr.mxu0 0.0
    %102 = vmatpush2.msra.mxu0 0.0
    %103 = vmatprep.subr.mxu0 0.0
    %104 = vmatpush2.msra.mxu0 0.0
    %105 = vmatprep.subr.mxu0 0.0
    %106 = vmatpush2.msra.mxu0 0.0
    %107 = vmatprep.subr.mxu0 0.0
    %108 = vmatpush2.msra.mxu0 0.0
    %109 = vmatprep.subr.mxu0 0.0
    %110 = vmatpush2.msra.mxu0 0.0
    %111 = vmatprep.subr.mxu0 0.0
    %112 = vmatpush2.msra.mxu0 0.0
    %113 = vmatprep.subr.mxu0 0.0
    %114 = vmatpush2.msra.mxu0 0.0
    %115 = vmatprep.subr.mxu0 0.0
    %116 = vmatpush2.msra.mxu0 0.0
    %117 = vmatprep.subr.mxu0 0.0
    %118 = vmatpush2.msra.mxu0 0.0
    %119 = vmatprep.subr.mxu0 0.0
    %120 = vmatpush2.msra.mxu0 0.0
    %121 = vmatprep.subr.mxu0 0.0
    %122 = vmatpush2.msra.mxu0 0.0
    %123 = vmatprep.subr.mxu0 0.0
    %124 = vmatpush2.msra.mxu0 0.0
    %125 = vmatprep.subr.mxu0 0.0
    %126 = vmatpush2.msra.mxu0 0.0
    %127 = vmatprep.mubr.f32.mxu0 0.0
    %128 = vmatmul.mubr.f32.gmra.mxu0 %v58
    %v129 = vpop.f32.mrf.mxu0
    %v130 = vadd.f32 %v49, %v129
    %v131 = vpop.f32.mrf.mxu0
    %v132 = vadd.f32 %v53, %v131
    %133 = vmatprep.mubr.f32.mxu0 0.0
    %134 = vmatmul.mubr.f32.gmra.mxu0 %v61
    %v135 = vpop.f32.mrf.mxu0
    %v136 = vadd.f32 %v49, %v135
    %v137 = vpop.f32.mrf.mxu0
    %v138 = vadd.f32 %v53, %v137
    %139 = vdwg.mxu0
    %v140 = vld [vmem:[#allocation3] sm:$0xff]
    %v141 = vld [vmem:[#allocation3 + $0x8] sm:$0xff]
    %v142 = vld [vmem:[#allocation3 + $0x10] sm:$0xff]
    %v143 = vld [vmem:[#allocation3 + $0x18] sm:$0xff]
    %v144 = vld [vmem:[#allocation3 + $0x20] sm:$0xff]
    %v145 = vld [vmem:[#allocation3 + $0x28] sm:$0xff]
    %v146 = vld [vmem:[#allocation3 + $0x30] sm:$0xff]
    %v147 = vld [vmem:[#allocation3 + $0x38] sm:$0xff]
    %v148 = vld [vmem:[#allocation3 + $0x40] sm:$0xff]
    %v149 = vld [vmem:[#allocation3 + $0x48] sm:$0xff]
    %v150 = vld [vmem:[#allocation3 + $0x50] sm:$0xff]
    %v151 = vld [vmem:[#allocation3 + $0x58] sm:$0xff]
    %v152 = vld [vmem:[#allocation3 + $0x60] sm:$0xff]
    %v153 = vld [vmem:[#allocation3 + $0x68] sm:$0xff]
    %v154 = vld [vmem:[#allocation3 + $0x70] sm:$0xff]
    %v155 = vld [vmem:[#allocation3 + $0x78] sm:$0xff]
    %vm156 = vcmask 523264
    %v158 = vsel %vm156, 0.0, 0
    %160 = vmatprep.subr.mxu0 0.0
    %161 = vmatpush1.msra.mxu0 0.0
    %162 = vmatprep.subr.mxu0 0.0
    %163 = vmatpush1.msra.mxu0 0.0
    %164 = vmatprep.subr.mxu0 0.0
    %165 = vmatpush1.msra.mxu0 0.0
    %166 = vmatprep.subr.mxu0 0.0
    %167 = vmatpush1.msra.mxu0 0.0
    %168 = vmatprep.subr.mxu0 0.0
    %169 = vmatpush1.msra.mxu0 0.0
    %170 = vmatprep.subr.mxu0 0.0
    %171 = vmatpush1.msra.mxu0 0.0
    %172 = vmatprep.subr.mxu0 0.0
    %173 = vmatpush1.msra.mxu0 0.0
    %174 = vmatprep.subr.mxu0 0.0
    %175 = vmatpush1.msra.mxu0 0.0
    %176 = vmatprep.subr.mxu0 %v155
    %177 = vmatpush1.msra.mxu0 %v154
    %178 = vmatprep.subr.mxu0 %v153
    %179 = vmatpush1.msra.mxu0 %v152
    %180 = vmatprep.subr.mxu0 %v151
    %181 = vmatpush1.msra.mxu0 %v150
    %182 = vmatprep.subr.mxu0 %v149
    %183 = vmatpush1.msra.mxu0 %v148
    %184 = vmatprep.subr.mxu0 %v147
    %185 = vmatpush1.msra.mxu0 %v146
    %186 = vmatprep.subr.mxu0 %v145
    %187 = vmatpush1.msra.mxu0 %v144
    %188 = vmatprep.subr.mxu0 %v143
    %189 = vmatpush1.msra.mxu0 %v142
    %190 = vmatprep.subr.mxu0 %v141
    %191 = vmatpush1.msra.mxu0 %v140
    %192 = vmatprep.subr.mxu0 0.0
    %193 = vmatpush2.msra.mxu0 0.0
    %194 = vmatprep.subr.mxu0 0.0
    %195 = vmatpush2.msra.mxu0 0.0
    %196 = vmatprep.subr.mxu0 0.0
    %197 = vmatpush2.msra.mxu0 0.0
    %198 = vmatprep.subr.mxu0 0.0
    %199 = vmatpush2.msra.mxu0 0.0
    %200 = vmatprep.subr.mxu0 0.0
    %201 = vmatpush2.msra.mxu0 0.0
    %202 = vmatprep.subr.mxu0 0.0
    %203 = vmatpush2.msra.mxu0 0.0
    %204 = vmatprep.subr.mxu0 0.0
    %205 = vmatpush2.msra.mxu0 0.0
    %206 = vmatprep.subr.mxu0 0.0
    %207 = vmatpush2.msra.mxu0 0.0
    %208 = vmatprep.subr.mxu0 0.0
    %209 = vmatpush2.msra.mxu0 0.0
    %210 = vmatprep.subr.mxu0 0.0
    %211 = vmatpush2.msra.mxu0 0.0
    %212 = vmatprep.subr.mxu0 0.0
    %213 = vmatpush2.msra.mxu0 0.0
    %214 = vmatprep.subr.mxu0 0.0
    %215 = vmatpush2.msra.mxu0 0.0
    %216 = vmatprep.subr.mxu0 0.0
    %217 = vmatpush2.msra.mxu0 0.0
    %218 = vmatprep.subr.mxu0 0.0
    %219 = vmatpush2.msra.mxu0 0.0
    %220 = vmatprep.subr.mxu0 0.0
    %221 = vmatpush2.msra.mxu0 0.0
    %222 = vmatprep.subr.mxu0 0.0
    %223 = vmatpush2.msra.mxu0 0.0
    %224 = vmatprep.mubr.f32.mxu0 0.0
    %225 = vmatmul.mubr.f32.gmra.mxu0 %v158
    %v226 = vpop.f32.mrf.mxu0
    %v227 = vadd.f32 0.0, %v226
    %v228 = vpop.f32.mrf.mxu0
    %v229 = vadd.f32 0.0, %v228
    %230 = vdwg.mxu0
    %v231 = vadd.f32 %v130, %v227
    %v233 = vrot.slane %v229, 2
    %v235 = vadd.f32 %v138, %v233
    %v236 = vxor.u32 %v231, 2147483648
    %v237 = vmul.f32 %v236, 1.442695
    %v238 = vpow.pop %v237
    %v239 = vadd.f32 %v238, 1.0
    %v240 = vrcp.pop %v239
    %v241 = vmul.f32 1.0, %v240
    %v242 = vtanh.pop %v231
    %v243 = vxor.u32 %v235, 2147483648
    %v244 = vmul.f32 %v243, 1.442695
    %v245 = vpow.pop %v244
    %v246 = vadd.f32 %v245, 1.0
    %v247 = vrcp.pop %v246
    %v248 = vmul.f32 1.0, %v247
    %v249 = vtanh.pop %v235
    %v250 = vmul.f32 %v241, 0.0
    %252 = vrot.lane.b32.xlu0 %v242, 64
    %v253 = vpop.permute.xlu0 %252
    %v255 = vmul.f32 %v241, %v253
    %257 = vrot.lane.b32.xlu0 %v255, 32
    %v258 = vpop.permute.xlu0 %257
    %v260 = vadd.f32 %v250, %v258
    %v261 = vmul.f32 %v248, 0.0
    %263 = vrot.lane.b32.xlu0 %v249, 64
    %v264 = vpop.permute.xlu0 %263
    %v266 = vmul.f32 %v248, %v264
    %268 = vrot.lane.b32.xlu0 %v266, 32
    %v269 = vpop.permute.xlu0 %268
    %v271 = vadd.f32 %v261, %v269
    %v272 = vtanh.pop %v260
    %274 = vrot.lane.b32.xlu0 %v272, 64
    %v275 = vpop.permute.xlu0 %274
    %v277 = vmul.f32 %v241, %v275
    %v278 = vtanh.pop %v271
    %280 = vrot.lane.b32.xlu0 %v278, 64
    %v281 = vpop.permute.xlu0 %280
    %v283 = vmul.f32 %v248, %v281
    %285 = vrot.lane.b32.xlu0 %v277, 32
    %v286 = vpop.permute.xlu0 %285
    %v289 = vrot.slane %v283, 6
    %290 = vrot.lane.b32.xlu0 %v289, 64
    %v291 = vpop.permute.xlu0 %290
    %vm293 = vcmask 261120
    %v294 = vsel %vm293, %v286, %v291
    %296 = vrot.lane.b32.xlu0 %v260, 96
    %v297 = vpop.permute.xlu0 %296
    %v300 = vrot.slane %v271, 6
    %v302 = vsel %vm293, %v297, %v300
    %vm303 = vcmask 254976
    %304 = vst.msk [vmem:[#allocation2] sm:$0x3] %vm303, %v286
    %305 = vrot.lane.b32.xlu0 %v283, 64
    %v306 = vpop.permute.xlu0 %305
    %vm308 = vcmask 523526
    %309 = vst.msk [vmem:[#allocation2 + $0x8] sm:$0xc0] %vm308, %v306
    %v310 = vld [vmem:[#allocation3] sm:$0xff]
    %v311 = vld [vmem:[#allocation3 + $0x8] sm:$0xff]
    %v312 = vld [vmem:[#allocation3 + $0x10] sm:$0xff]
    %v313 = vld [vmem:[#allocation3 + $0x18] sm:$0xff]
    %v314 = vld [vmem:[#allocation3 + $0x20] sm:$0xff]
    %v315 = vld [vmem:[#allocation3 + $0x28] sm:$0xff]
    %v316 = vld [vmem:[#allocation3 + $0x30] sm:$0xff]
    %v317 = vld [vmem:[#allocation3 + $0x38] sm:$0xff]
    %v318 = vld [vmem:[#allocation3 + $0x40] sm:$0xff]
    %v319 = vld [vmem:[#allocation3 + $0x48] sm:$0xff]
    %v320 = vld [vmem:[#allocation3 + $0x50] sm:$0xff]
    %v321 = vld [vmem:[#allocation3 + $0x58] sm:$0xff]
    %v322 = vld [vmem:[#allocation3 + $0x60] sm:$0xff]
    %v323 = vld [vmem:[#allocation3 + $0x68] sm:$0xff]
    %v324 = vld [vmem:[#allocation3 + $0x70] sm:$0xff]
    %v325 = vld [vmem:[#allocation3 + $0x78] sm:$0xff]
    %v327 = vsel %vm156, %v294, 0
    %329 = vmatprep.subr.mxu0 0.0
    %330 = vmatpush1.msra.mxu0 0.0
    %331 = vmatprep.subr.mxu0 0.0
    %332 = vmatpush1.msra.mxu0 0.0
    %333 = vmatprep.subr.mxu0 0.0
    %334 = vmatpush1.msra.mxu0 0.0
    %335 = vmatprep.subr.mxu0 0.0
    %336 = vmatpush1.msra.mxu0 0.0
    %337 = vmatprep.subr.mxu0 0.0
    %338 = vmatpush1.msra.mxu0 0.0
    %339 = vmatprep.subr.mxu0 0.0
    %340 = vmatpush1.msra.mxu0 0.0
    %341 = vmatprep.subr.mxu0 0.0
    %342 = vmatpush1.msra.mxu0 0.0
    %343 = vmatprep.subr.mxu0 0.0
    %344 = vmatpush1.msra.mxu0 0.0
    %345 = vmatprep.subr.mxu0 %v325
    %346 = vmatpush1.msra.mxu0 %v324
    %347 = vmatprep.subr.mxu0 %v323
    %348 = vmatpush1.msra.mxu0 %v322
    %349 = vmatprep.subr.mxu0 %v321
    %350 = vmatpush1.msra.mxu0 %v320
    %351 = vmatprep.subr.mxu0 %v319
    %352 = vmatpush1.msra.mxu0 %v318
    %353 = vmatprep.subr.mxu0 %v317
    %354 = vmatpush1.msra.mxu0 %v316
    %355 = vmatprep.subr.mxu0 %v315
    %356 = vmatpush1.msra.mxu0 %v314
    %357 = vmatprep.subr.mxu0 %v313
    %358 = vmatpush1.msra.mxu0 %v312
    %359 = vmatprep.subr.mxu0 %v311
    %360 = vmatpush1.msra.mxu0 %v310
    %361 = vmatprep.subr.mxu0 0.0
    %362 = vmatpush2.msra.mxu0 0.0
    %363 = vmatprep.subr.mxu0 0.0
    %364 = vmatpush2.msra.mxu0 0.0
    %365 = vmatprep.subr.mxu0 0.0
    %366 = vmatpush2.msra.mxu0 0.0
    %367 = vmatprep.subr.mxu0 0.0
    %368 = vmatpush2.msra.mxu0 0.0
    %369 = vmatprep.subr.mxu0 0.0
    %370 = vmatpush2.msra.mxu0 0.0
    %371 = vmatprep.subr.mxu0 0.0
    %372 = vmatpush2.msra.mxu0 0.0
    %373 = vmatprep.subr.mxu0 0.0
    %374 = vmatpush2.msra.mxu0 0.0
    %375 = vmatprep.subr.mxu0 0.0
    %376 = vmatpush2.msra.mxu0 0.0
    %377 = vmatprep.subr.mxu0 0.0
    %378 = vmatpush2.msra.mxu0 0.0
    %379 = vmatprep.subr.mxu0 0.0
    %380 = vmatpush2.msra.mxu0 0.0
    %381 = vmatprep.subr.mxu0 0.0
    %382 = vmatpush2.msra.mxu0 0.0
    %383 = vmatprep.subr.mxu0 0.0
    %384 = vmatpush2.msra.mxu0 0.0
    %385 = vmatprep.subr.mxu0 0.0
    %386 = vmatpush2.msra.mxu0 0.0
    %387 = vmatprep.subr.mxu0 0.0
    %388 = vmatpush2.msra.mxu0 0.0
    %389 = vmatprep.subr.mxu0 0.0
    %390 = vmatpush2.msra.mxu0 0.0
    %391 = vmatprep.subr.mxu0 0.0
    %392 = vmatpush2.msra.mxu0 0.0
    %393 = vmatprep.mubr.f32.mxu0 0.0
    %394 = vmatmul.mubr.f32.gmra.mxu0 %v327
    %v395 = vpop.f32.mrf.mxu0
    %v396 = vadd.f32 0.0, %v395
    %v397 = vpop.f32.mrf.mxu0
    %v398 = vadd.f32 0.0, %v397
    %399 = vdwg.mxu0
    %v401 = vrot.slane %v396, 6
    %v403 = vadd.f32 %v130, %v401
    %v405 = vrot.slane %v398, 4
    %v407 = vadd.f32 %v138, %v405
    %v408 = vxor.u32 %v403, 2147483648
    %v409 = vmul.f32 %v408, 1.442695
    %v410 = vpow.pop %v409
    %v411 = vadd.f32 %v410, 1.0
    %v412 = vrcp.pop %v411
    %v413 = vmul.f32 1.0, %v412
    %v414 = vtanh.pop %v403
    %v415 = vxor.u32 %v407, 2147483648
    %v416 = vmul.f32 %v415, 1.442695
    %v417 = vpow.pop %v416
    %v418 = vadd.f32 %v417, 1.0
    %v419 = vrcp.pop %v418
    %v420 = vmul.f32 1.0, %v419
    %v421 = vtanh.pop %v407
    %v423 = vrot.slane %v302, 6
    %424 = vrot.lane.b32.xlu0 %v423, 32
    %v425 = vpop.permute.xlu0 %424
    %v427 = vmul.f32 %v413, %v425
    %429 = vrot.lane.b32.xlu0 %v414, 64
    %v430 = vpop.permute.xlu0 %429
    %v432 = vmul.f32 %v413, %v430
    %434 = vrot.lane.b32.xlu0 %v432, 32
    %v435 = vpop.permute.xlu0 %434
    %v437 = vadd.f32 %v427, %v435
    %v438 = vrot.slane %v302, 4
    %v440 = vmul.f32 %v420, %v438
    %442 = vrot.lane.b32.xlu0 %v421, 64
    %v443 = vpop.permute.xlu0 %442
    %v445 = vmul.f32 %v420, %v443
    %447 = vrot.lane.b32.xlu0 %v445, 32
    %v448 = vpop.permute.xlu0 %447
    %v450 = vadd.f32 %v440, %v448
    %v451 = vtanh.pop %v437
    %453 = vrot.lane.b32.xlu0 %v451, 64
    %v454 = vpop.permute.xlu0 %453
    %v456 = vmul.f32 %v413, %v454
    %v457 = vtanh.pop %v450
    %459 = vrot.lane.b32.xlu0 %v457, 64
    %v460 = vpop.permute.xlu0 %459
    %v462 = vmul.f32 %v420, %v460
    %464 = vrot.lane.b32.xlu0 %v456, 32
    %v465 = vpop.permute.xlu0 %464
    %v468 = vrot.slane %v462, 2
    %469 = vrot.lane.b32.xlu0 %v468, 64
    %v470 = vpop.permute.xlu0 %469
    %v472 = vsel %vm293, %v465, %v470
    %474 = vrot.lane.b32.xlu0 %v437, 96
    %v475 = vpop.permute.xlu0 %474
    %v478 = vrot.slane %v450, 2
    %v480 = vsel %vm293, %v475, %v478
    %vm481 = vcmask 257026
    %482 = vst.msk [vmem:[#allocation2] sm:$0xc] %vm481, %v465
    %483 = vrot.lane.b32.xlu0 %v462, 64
    %v484 = vpop.permute.xlu0 %483
    %vm486 = vcmask 521476
    %487 = vst.msk [vmem:[#allocation2 + $0x8] sm:$0x30] %vm486, %v484
    %v488 = vld [vmem:[#allocation3] sm:$0xff]
    %v489 = vld [vmem:[#allocation3 + $0x8] sm:$0xff]
    %v490 = vld [vmem:[#allocation3 + $0x10] sm:$0xff]
    %v491 = vld [vmem:[#allocation3 + $0x18] sm:$0xff]
    %v492 = vld [vmem:[#allocation3 + $0x20] sm:$0xff]
    %v493 = vld [vmem:[#allocation3 + $0x28] sm:$0xff]
    %v494 = vld [vmem:[#allocation3 + $0x30] sm:$0xff]
    %v495 = vld [vmem:[#allocation3 + $0x38] sm:$0xff]
    %v496 = vld [vmem:[#allocation3 + $0x40] sm:$0xff]
    %v497 = vld [vmem:[#allocation3 + $0x48] sm:$0xff]
    %v498 = vld [vmem:[#allocation3 + $0x50] sm:$0xff]
    %v499 = vld [vmem:[#allocation3 + $0x58] sm:$0xff]
    %v500 = vld [vmem:[#allocation3 + $0x60] sm:$0xff]
    %v501 = vld [vmem:[#allocation3 + $0x68] sm:$0xff]
    %v502 = vld [vmem:[#allocation3 + $0x70] sm:$0xff]
    %v503 = vld [vmem:[#allocation3 + $0x78] sm:$0xff]
    %v505 = vrot.slane %v472, 2
    %v506 = vsel %vm156, %v505, 0
    %508 = vmatprep.subr.mxu0 0.0
    %509 = vmatpush1.msra.mxu0 0.0
    %510 = vmatprep.subr.mxu0 0.0
    %511 = vmatpush1.msra.mxu0 0.0
    %512 = vmatprep.subr.mxu0 0.0
    %513 = vmatpush1.msra.mxu0 0.0
    %514 = vmatprep.subr.mxu0 0.0
    %515 = vmatpush1.msra.mxu0 0.0
    %516 = vmatprep.subr.mxu0 0.0
    %517 = vmatpush1.msra.mxu0 0.0
    %518 = vmatprep.subr.mxu0 0.0
    %519 = vmatpush1.msra.mxu0 0.0
    %520 = vmatprep.subr.mxu0 0.0
    %521 = vmatpush1.msra.mxu0 0.0
    %522 = vmatprep.subr.mxu0 0.0
    %523 = vmatpush1.msra.mxu0 0.0
    %524 = vmatprep.subr.mxu0 %v503
    %525 = vmatpush1.msra.mxu0 %v502
    %526 = vmatprep.subr.mxu0 %v501
    %527 = vmatpush1.msra.mxu0 %v500
    %528 = vmatprep.subr.mxu0 %v499
    %529 = vmatpush1.msra.mxu0 %v498
    %530 = vmatprep.subr.mxu0 %v497
    %531 = vmatpush1.msra.mxu0 %v496
    %532 = vmatprep.subr.mxu0 %v495
    %533 = vmatpush1.msra.mxu0 %v494
    %534 = vmatprep.subr.mxu0 %v493
    %535 = vmatpush1.msra.mxu0 %v492
    %536 = vmatprep.subr.mxu0 %v491
    %537 = vmatpush1.msra.mxu0 %v490
    %538 = vmatprep.subr.mxu0 %v489
    %539 = vmatpush1.msra.mxu0 %v488
    %540 = vmatprep.subr.mxu0 0.0
    %541 = vmatpush2.msra.mxu0 0.0
    %542 = vmatprep.subr.mxu0 0.0
    %543 = vmatpush2.msra.mxu0 0.0
    %544 = vmatprep.subr.mxu0 0.0
    %545 = vmatpush2.msra.mxu0 0.0
    %546 = vmatprep.subr.mxu0 0.0
    %547 = vmatpush2.msra.mxu0 0.0
    %548 = vmatprep.subr.mxu0 0.0
    %549 = vmatpush2.msra.mxu0 0.0
    %550 = vmatprep.subr.mxu0 0.0
    %551 = vmatpush2.msra.mxu0 0.0
    %552 = vmatprep.subr.mxu0 0.0
    %553 = vmatpush2.msra.mxu0 0.0
    %554 = vmatprep.subr.mxu0 0.0
    %555 = vmatpush2.msra.mxu0 0.0
    %556 = vmatprep.subr.mxu0 0.0
    %557 = vmatpush2.msra.mxu0 0.0
    %558 = vmatprep.subr.mxu0 0.0
    %559 = vmatpush2.msra.mxu0 0.0
    %560 = vmatprep.subr.mxu0 0.0
    %561 = vmatpush2.msra.mxu0 0.0
    %562 = vmatprep.subr.mxu0 0.0
    %563 = vmatpush2.msra.mxu0 0.0
    %564 = vmatprep.subr.mxu0 0.0
    %565 = vmatpush2.msra.mxu0 0.0
    %566 = vmatprep.subr.mxu0 0.0
    %567 = vmatpush2.msra.mxu0 0.0
    %568 = vmatprep.subr.mxu0 0.0
    %569 = vmatpush2.msra.mxu0 0.0
    %570 = vmatprep.subr.mxu0 0.0
    %571 = vmatpush2.msra.mxu0 0.0
    %572 = vmatprep.mubr.f32.mxu0 0.0
    %573 = vmatmul.mubr.f32.gmra.mxu0 %v506
    %v574 = vpop.f32.mrf.mxu0
    %v575 = vadd.f32 0.0, %v574
    %v576 = vpop.f32.mrf.mxu0
    %v577 = vadd.f32 0.0, %v576
    %578 = vdwg.mxu0
    %v580 = vrot.slane %v575, 4
    %v582 = vadd.f32 %v130, %v580
    %v584 = vrot.slane %v577, 6
    %v586 = vadd.f32 %v138, %v584
    %v587 = vxor.u32 %v582, 2147483648
    %v588 = vmul.f32 %v587, 1.442695
    %v589 = vpow.pop %v588
    %v590 = vadd.f32 %v589, 1.0
    %v591 = vrcp.pop %v590
    %v592 = vmul.f32 1.0, %v591
    %v593 = vtanh.pop %v582
    %v594 = vxor.u32 %v586, 2147483648
    %v595 = vmul.f32 %v594, 1.442695
    %v596 = vpow.pop %v595
    %v597 = vadd.f32 %v596, 1.0
    %v598 = vrcp.pop %v597
    %v599 = vmul.f32 1.0, %v598
    %v600 = vtanh.pop %v586
    %v602 = vrot.slane %v480, 6
    %603 = vrot.lane.b32.xlu0 %v602, 32
    %v604 = vpop.permute.xlu0 %603
    %v606 = vmul.f32 %v592, %v604
    %608 = vrot.lane.b32.xlu0 %v593, 64
    %v609 = vpop.permute.xlu0 %608
    %v611 = vmul.f32 %v592, %v609
    %613 = vrot.lane.b32.xlu0 %v611, 32
    %v614 = vpop.permute.xlu0 %613
    %v616 = vadd.f32 %v606, %v614
    %v617 = vmul.f32 %v599, %v480
    %619 = vrot.lane.b32.xlu0 %v600, 64
    %v620 = vpop.permute.xlu0 %619
    %v622 = vmul.f32 %v599, %v620
    %624 = vrot.lane.b32.xlu0 %v622, 32
    %v625 = vpop.permute.xlu0 %624
    %v627 = vadd.f32 %v617, %v625
    %v628 = vtanh.pop %v616
    %630 = vrot.lane.b32.xlu0 %v628, 64
    %v631 = vpop.permute.xlu0 %630
    %v633 = vmul.f32 %v592, %v631
    %v634 = vtanh.pop %v627
    %636 = vrot.lane.b32.xlu0 %v634, 64
    %v637 = vpop.permute.xlu0 %636
    %v639 = vmul.f32 %v599, %v637
    %641 = vrot.lane.b32.xlu0 %v633, 32
    %v642 = vpop.permute.xlu0 %641
    %v645 = vrot.slane %v639, 6
    %646 = vrot.lane.b32.xlu0 %v645, 64
    %v647 = vpop.permute.xlu0 %646
    %v649 = vsel %vm293, %v642, %v647
    %651 = vrot.lane.b32.xlu0 %v616, 96
    %v652 = vpop.permute.xlu0 %651
    %v655 = vrot.slane %v627, 6
    %v657 = vsel %vm293, %v652, %v655
    %vm658 = vcmask 259076
    %659 = vst.msk [vmem:[#allocation2] sm:$0x30] %vm658, %v642
    %660 = vrot.lane.b32.xlu0 %v639, 64
    %v661 = vpop.permute.xlu0 %660
    %vm663 = vcmask 519426
    %664 = vst.msk [vmem:[#allocation2 + $0x8] sm:$0xc] %vm663, %v661
    %v665 = vld [vmem:[#allocation3] sm:$0xff]
    %v666 = vld [vmem:[#allocation3 + $0x8] sm:$0xff]
    %v667 = vld [vmem:[#allocation3 + $0x10] sm:$0xff]
    %v668 = vld [vmem:[#allocation3 + $0x18] sm:$0xff]
    %v669 = vld [vmem:[#allocation3 + $0x20] sm:$0xff]
    %v670 = vld [vmem:[#allocation3 + $0x28] sm:$0xff]
    %v671 = vld [vmem:[#allocation3 + $0x30] sm:$0xff]
    %v672 = vld [vmem:[#allocation3 + $0x38] sm:$0xff]
    %v673 = vld [vmem:[#allocation3 + $0x40] sm:$0xff]
    %v674 = vld [vmem:[#allocation3 + $0x48] sm:$0xff]
    %v675 = vld [vmem:[#allocation3 + $0x50] sm:$0xff]
    %v676 = vld [vmem:[#allocation3 + $0x58] sm:$0xff]
    %v677 = vld [vmem:[#allocation3 + $0x60] sm:$0xff]
    %v678 = vld [vmem:[#allocation3 + $0x68] sm:$0xff]
    %v679 = vld [vmem:[#allocation3 + $0x70] sm:$0xff]
    %v680 = vld [vmem:[#allocation3 + $0x78] sm:$0xff]
    %v682 = vrot.slane %v649, 4
    %v683 = vsel %vm156, %v682, 0
    %685 = vmatprep.subr.mxu0 0.0
    %686 = vmatpush1.msra.mxu0 0.0
    %687 = vmatprep.subr.mxu0 0.0
    %688 = vmatpush1.msra.mxu0 0.0
    %689 = vmatprep.subr.mxu0 0.0
    %690 = vmatpush1.msra.mxu0 0.0
    %691 = vmatprep.subr.mxu0 0.0
    %692 = vmatpush1.msra.mxu0 0.0
    %693 = vmatprep.subr.mxu0 0.0
    %694 = vmatpush1.msra.mxu0 0.0
    %695 = vmatprep.subr.mxu0 0.0
    %696 = vmatpush1.msra.mxu0 0.0
    %697 = vmatprep.subr.mxu0 0.0
    %698 = vmatpush1.msra.mxu0 0.0
    %699 = vmatprep.subr.mxu0 0.0
    %700 = vmatpush1.msra.mxu0 0.0
    %701 = vmatprep.subr.mxu0 %v680
    %702 = vmatpush1.msra.mxu0 %v679
    %703 = vmatprep.subr.mxu0 %v678
    %704 = vmatpush1.msra.mxu0 %v677
    %705 = vmatprep.subr.mxu0 %v676
    %706 = vmatpush1.msra.mxu0 %v675
    %707 = vmatprep.subr.mxu0 %v674
    %708 = vmatpush1.msra.mxu0 %v673
    %709 = vmatprep.subr.mxu0 %v672
    %710 = vmatpush1.msra.mxu0 %v671
    %711 = vmatprep.subr.mxu0 %v670
    %712 = vmatpush1.msra.mxu0 %v669
    %713 = vmatprep.subr.mxu0 %v668
    %714 = vmatpush1.msra.mxu0 %v667
    %715 = vmatprep.subr.mxu0 %v666
    %716 = vmatpush1.msra.mxu0 %v665
    %717 = vmatprep.subr.mxu0 0.0
    %718 = vmatpush2.msra.mxu0 0.0
    %719 = vmatprep.subr.mxu0 0.0
    %720 = vmatpush2.msra.mxu0 0.0
    %721 = vmatprep.subr.mxu0 0.0
    %722 = vmatpush2.msra.mxu0 0.0
    %723 = vmatprep.subr.mxu0 0.0
    %724 = vmatpush2.msra.mxu0 0.0
    %725 = vmatprep.subr.mxu0 0.0
    %726 = vmatpush2.msra.mxu0 0.0
    %727 = vmatprep.subr.mxu0 0.0
    %728 = vmatpush2.msra.mxu0 0.0
    %729 = vmatprep.subr.mxu0 0.0
    %730 = vmatpush2.msra.mxu0 0.0
    %731 = vmatprep.subr.mxu0 0.0
    %732 = vmatpush2.msra.mxu0 0.0
    %733 = vmatprep.subr.mxu0 0.0
    %734 = vmatpush2.msra.mxu0 0.0
    %735 = vmatprep.subr.mxu0 0.0
    %736 = vmatpush2.msra.mxu0 0.0
    %737 = vmatprep.subr.mxu0 0.0
    %738 = vmatpush2.msra.mxu0 0.0
    %739 = vmatprep.subr.mxu0 0.0
    %740 = vmatpush2.msra.mxu0 0.0
    %741 = vmatprep.subr.mxu0 0.0
    %742 = vmatpush2.msra.mxu0 0.0
    %743 = vmatprep.subr.mxu0 0.0
    %744 = vmatpush2.msra.mxu0 0.0
    %745 = vmatprep.subr.mxu0 0.0
    %746 = vmatpush2.msra.mxu0 0.0
    %747 = vmatprep.subr.mxu0 0.0
    %748 = vmatpush2.msra.mxu0 0.0
    %749 = vmatprep.mubr.f32.mxu0 0.0
    %750 = vmatmul.mubr.f32.gmra.mxu0 %v683
    %v751 = vpop.f32.mrf.mxu0
    %v752 = vadd.f32 0.0, %v751
    %v753 = vpop.f32.mrf.mxu0
    %v754 = vadd.f32 0.0, %v753
    %755 = vdwg.mxu0
    %v757 = vrot.slane %v752, 2
    %v759 = vadd.f32 %v130, %v757
    %v760 = vadd.f32 %v138, %v754
    %v761 = vxor.u32 %v759, 2147483648
    %v762 = vmul.f32 %v761, 1.442695
    %v763 = vpow.pop %v762
    %v764 = vadd.f32 %v763, 1.0
    %v765 = vrcp.pop %v764
    %v766 = vmul.f32 1.0, %v765
    %v767 = vtanh.pop %v759
    %v768 = vxor.u32 %v760, 2147483648
    %v769 = vmul.f32 %v768, 1.442695
    %v770 = vpow.pop %v769
    %v771 = vadd.f32 %v770, 1.0
    %v772 = vrcp.pop %v771
    %v773 = vmul.f32 1.0, %v772
    %v774 = vtanh.pop %v760
    %v776 = vrot.slane %v657, 6
    %777 = vrot.lane.b32.xlu0 %v776, 32
    %v778 = vpop.permute.xlu0 %777
    %v780 = vmul.f32 %v766, %v778
    %782 = vrot.lane.b32.xlu0 %v767, 64
    %v783 = vpop.permute.xlu0 %782
    %v785 = vmul.f32 %v766, %v783
    %787 = vrot.lane.b32.xlu0 %v785, 32
    %v788 = vpop.permute.xlu0 %787
    %v790 = vadd.f32 %v780, %v788
    %v791 = vrot.slane %v657, 4
    %v793 = vmul.f32 %v773, %v791
    %795 = vrot.lane.b32.xlu0 %v774, 64
    %v796 = vpop.permute.xlu0 %795
    %v798 = vmul.f32 %v773, %v796
    %800 = vrot.lane.b32.xlu0 %v798, 32
    %v801 = vpop.permute.xlu0 %800
    %v803 = vadd.f32 %v793, %v801
    %v804 = vtanh.pop %v790
    %806 = vrot.lane.b32.xlu0 %v804, 64
    %v807 = vpop.permute.xlu0 %806
    %v809 = vmul.f32 %v766, %v807
    %v810 = vtanh.pop %v803
    %812 = vrot.lane.b32.xlu0 %v810, 64
    %v813 = vpop.permute.xlu0 %812
    %v815 = vmul.f32 %v773, %v813
    %817 = vrot.lane.b32.xlu0 %v809, 32
    %v818 = vpop.permute.xlu0 %817
    %v821 = vrot.slane %v815, 2
    %822 = vrot.lane.b32.xlu0 %v821, 64
    %v823 = vpop.permute.xlu0 %822
    %v825 = vsel %vm293, %v818, %v823
    %827 = vrot.lane.b32.xlu0 %v790, 96
    %v828 = vpop.permute.xlu0 %827
    %v831 = vrot.slane %v803, 2
    %v833 = vsel %vm293, %v828, %v831
    %vm834 = vcmask 261126
    %835 = vst.msk [vmem:[#allocation2] sm:$0xc0] %vm834, %v818
    %836 = vrot.lane.b32.xlu0 %v815, 64
    %v837 = vpop.permute.xlu0 %836
    %vm839 = vcmask 517376
    %840 = vst.msk [vmem:[#allocation2 + $0x8] sm:$0x3] %vm839, %v837
    %v841 = vld [vmem:[#allocation3] sm:$0xff]
    %v842 = vld [vmem:[#allocation3 + $0x8] sm:$0xff]
    %v843 = vld [vmem:[#allocation3 + $0x10] sm:$0xff]
    %v844 = vld [vmem:[#allocation3 + $0x18] sm:$0xff]
    %v845 = vld [vmem:[#allocation3 + $0x20] sm:$0xff]
    %v846 = vld [vmem:[#allocation3 + $0x28] sm:$0xff]
    %v847 = vld [vmem:[#allocation3 + $0x30] sm:$0xff]
    %v848 = vld [vmem:[#allocation3 + $0x38] sm:$0xff]
    %v849 = vld [vmem:[#allocation3 + $0x40] sm:$0xff]
    %v850 = vld [vmem:[#allocation3 + $0x48] sm:$0xff]
    %v851 = vld [vmem:[#allocation3 + $0x50] sm:$0xff]
    %v852 = vld [vmem:[#allocation3 + $0x58] sm:$0xff]
    %v853 = vld [vmem:[#allocation3 + $0x60] sm:$0xff]
    %v854 = vld [vmem:[#allocation3 + $0x68] sm:$0xff]
    %v855 = vld [vmem:[#allocation3 + $0x70] sm:$0xff]
    %v856 = vld [vmem:[#allocation3 + $0x78] sm:$0xff]
    %v858 = vrot.slane %v825, 6
    %v859 = vsel %vm156, %v858, 0
    %861 = vmatprep.subr.mxu0 0.0
    %862 = vmatpush1.msra.mxu0 0.0
    %863 = vmatprep.subr.mxu0 0.0
    %864 = vmatpush1.msra.mxu0 0.0
    %865 = vmatprep.subr.mxu0 0.0
    %866 = vmatpush1.msra.mxu0 0.0
    %867 = vmatprep.subr.mxu0 0.0
    %868 = vmatpush1.msra.mxu0 0.0
    %869 = vmatprep.subr.mxu0 0.0
    %870 = vmatpush1.msra.mxu0 0.0
    %871 = vmatprep.subr.mxu0 0.0
    %872 = vmatpush1.msra.mxu0 0.0
    %873 = vmatprep.subr.mxu0 0.0
    %874 = vmatpush1.msra.mxu0 0.0
    %875 = vmatprep.subr.mxu0 0.0
    %876 = vmatpush1.msra.mxu0 0.0
    %877 = vmatprep.subr.mxu0 %v856
    %878 = vmatpush1.msra.mxu0 %v855
    %879 = vmatprep.subr.mxu0 %v854
    %880 = vmatpush1.msra.mxu0 %v853
    %881 = vmatprep.subr.mxu0 %v852
    %882 = vmatpush1.msra.mxu0 %v851
    %883 = vmatprep.subr.mxu0 %v850
    %884 = vmatpush1.msra.mxu0 %v849
    %885 = vmatprep.subr.mxu0 %v848
    %886 = vmatpush1.msra.mxu0 %v847
    %887 = vmatprep.subr.mxu0 %v846
    %888 = vmatpush1.msra.mxu0 %v845
    %889 = vmatprep.subr.mxu0 %v844
    %890 = vmatpush1.msra.mxu0 %v843
    %891 = vmatprep.subr.mxu0 %v842
    %892 = vmatpush1.msra.mxu0 %v841
    %893 = vmatprep.subr.mxu0 0.0
    %894 = vmatpush2.msra.mxu0 0.0
    %895 = vmatprep.subr.mxu0 0.0
    %896 = vmatpush2.msra.mxu0 0.0
    %897 = vmatprep.subr.mxu0 0.0
    %898 = vmatpush2.msra.mxu0 0.0
    %899 = vmatprep.subr.mxu0 0.0
    %900 = vmatpush2.msra.mxu0 0.0
    %901 = vmatprep.subr.mxu0 0.0
    %902 = vmatpush2.msra.mxu0 0.0
    %903 = vmatprep.subr.mxu0 0.0
    %904 = vmatpush2.msra.mxu0 0.0
    %905 = vmatprep.subr.mxu0 0.0
    %906 = vmatpush2.msra.mxu0 0.0
    %907 = vmatprep.subr.mxu0 0.0
    %908 = vmatpush2.msra.mxu0 0.0
    %909 = vmatprep.subr.mxu0 0.0
    %910 = vmatpush2.msra.mxu0 0.0
    %911 = vmatprep.subr.mxu0 0.0
    %912 = vmatpush2.msra.mxu0 0.0
    %913 = vmatprep.subr.mxu0 0.0
    %914 = vmatpush2.msra.mxu0 0.0
    %915 = vmatprep.subr.mxu0 0.0
    %916 = vmatpush2.msra.mxu0 0.0
    %917 = vmatprep.subr.mxu0 0.0
    %918 = vmatpush2.msra.mxu0 0.0
    %919 = vmatprep.subr.mxu0 0.0
    %920 = vmatpush2.msra.mxu0 0.0
    %921 = vmatprep.subr.mxu0 0.0
    %922 = vmatpush2.msra.mxu0 0.0
    %923 = vmatprep.subr.mxu0 0.0
    %924 = vmatpush2.msra.mxu0 0.0
    %925 = vmatprep.mubr.f32.mxu0 0.0
    %926 = vmatmul.mubr.f32.gmra.mxu0 %v859
    %v927 = vpop.f32.mrf.mxu0
    %v928 = vadd.f32 0.0, %v927
    %v929 = vpop.f32.mrf.mxu0
    %v930 = vadd.f32 0.0, %v929
    %931 = vdwg.mxu0
    %v932 = vadd.f32 %v136, %v928
    %v934 = vrot.slane %v930, 2
    %v936 = vadd.f32 %v132, %v934
    %v937 = vxor.u32 %v932, 2147483648
    %v938 = vmul.f32 %v937, 1.442695
    %v939 = vpow.pop %v938
    %v940 = vadd.f32 %v939, 1.0
    %v941 = vrcp.pop %v940
    %v942 = vmul.f32 1.0, %v941
    %v943 = vtanh.pop %v932
    %v944 = vxor.u32 %v936, 2147483648
    %v945 = vmul.f32 %v944, 1.442695
    %v946 = vpow.pop %v945
    %v947 = vadd.f32 %v946, 1.0
    %v948 = vrcp.pop %v947
    %v949 = vmul.f32 1.0, %v948
    %v950 = vtanh.pop %v936
    %v952 = vrot.slane %v833, 6
    %953 = vrot.lane.b32.xlu0 %v952, 32
    %v954 = vpop.permute.xlu0 %953
    %v956 = vmul.f32 %v942, %v954
    %958 = vrot.lane.b32.xlu0 %v943, 64
    %v959 = vpop.permute.xlu0 %958
    %v961 = vmul.f32 %v942, %v959
    %963 = vrot.lane.b32.xlu0 %v961, 32
    %v964 = vpop.permute.xlu0 %963
    %v966 = vadd.f32 %v956, %v964
    %v967 = vmul.f32 %v949, %v833
    %969 = vrot.lane.b32.xlu0 %v950, 64
    %v970 = vpop.permute.xlu0 %969
    %v972 = vmul.f32 %v949, %v970
    %974 = vrot.lane.b32.xlu0 %v972, 32
    %v975 = vpop.permute.xlu0 %974
    %v977 = vadd.f32 %v967, %v975
    %v978 = vtanh.pop %v966
    %980 = vrot.lane.b32.xlu0 %v978, 64
    %v981 = vpop.permute.xlu0 %980
    %v983 = vmul.f32 %v942, %v981
    %v984 = vtanh.pop %v977
    %986 = vrot.lane.b32.xlu0 %v984, 64
    %v987 = vpop.permute.xlu0 %986
    %v989 = vmul.f32 %v949, %v987
    %991 = vrot.lane.b32.xlu0 %v983, 32
    %v992 = vpop.permute.xlu0 %991
    %v995 = vrot.slane %v989, 6
    %996 = vrot.lane.b32.xlu0 %v995, 64
    %v997 = vpop.permute.xlu0 %996
    %v999 = vsel %vm293, %v992, %v997
    %1001 = vrot.lane.b32.xlu0 %v966, 96
    %v1002 = vpop.permute.xlu0 %1001
    %v1005 = vrot.slane %v977, 6
    %v1007 = vsel %vm293, %v1002, %v1005
    %1008 = vst.msk [vmem:[#allocation2 + $0x8] sm:$0x3] %vm303, %v992
    %1009 = vrot.lane.b32.xlu0 %v989, 64
    %v1010 = vpop.permute.xlu0 %1009
    %1012 = vst.msk [vmem:[#allocation2] sm:$0xc0] %vm308, %v1010
    %v1013 = vld [vmem:[#allocation3] sm:$0xff]
    %v1014 = vld [vmem:[#allocation3 + $0x8] sm:$0xff]
    %v1015 = vld [vmem:[#allocation3 + $0x10] sm:$0xff]
    %v1016 = vld [vmem:[#allocation3 + $0x18] sm:$0xff]
    %v1017 = vld [vmem:[#allocation3 + $0x20] sm:$0xff]
    %v1018 = vld [vmem:[#allocation3 + $0x28] sm:$0xff]
    %v1019 = vld [vmem:[#allocation3 + $0x30] sm:$0xff]
    %v1020 = vld [vmem:[#allocation3 + $0x38] sm:$0xff]
    %v1021 = vld [vmem:[#allocation3 + $0x40] sm:$0xff]
    %v1022 = vld [vmem:[#allocation3 + $0x48] sm:$0xff]
    %v1023 = vld [vmem:[#allocation3 + $0x50] sm:$0xff]
    %v1024 = vld [vmem:[#allocation3 + $0x58] sm:$0xff]
    %v1025 = vld [vmem:[#allocation3 + $0x60] sm:$0xff]
    %v1026 = vld [vmem:[#allocation3 + $0x68] sm:$0xff]
    %v1027 = vld [vmem:[#allocation3 + $0x70] sm:$0xff]
    %v1028 = vld [vmem:[#allocation3 + $0x78] sm:$0xff]
    %v1030 = vsel %vm156, %v999, 0
    %1032 = vmatprep.subr.mxu0 0.0
    %1033 = vmatpush1.msra.mxu0 0.0
    %1034 = vmatprep.subr.mxu0 0.0
    %1035 = vmatpush1.msra.mxu0 0.0
    %1036 = vmatprep.subr.mxu0 0.0
    %1037 = vmatpush1.msra.mxu0 0.0
    %1038 = vmatprep.subr.mxu0 0.0
    %1039 = vmatpush1.msra.mxu0 0.0
    %1040 = vmatprep.subr.mxu0 0.0
    %1041 = vmatpush1.msra.mxu0 0.0
    %1042 = vmatprep.subr.mxu0 0.0
    %1043 = vmatpush1.msra.mxu0 0.0
    %1044 = vmatprep.subr.mxu0 0.0
    %1045 = vmatpush1.msra.mxu0 0.0
    %1046 = vmatprep.subr.mxu0 0.0
    %1047 = vmatpush1.msra.mxu0 0.0
    %1048 = vmatprep.subr.mxu0 %v1028
    %1049 = vmatpush1.msra.mxu0 %v1027
    %1050 = vmatprep.subr.mxu0 %v1026
    %1051 = vmatpush1.msra.mxu0 %v1025
    %1052 = vmatprep.subr.mxu0 %v1024
    %1053 = vmatpush1.msra.mxu0 %v1023
    %1054 = vmatprep.subr.mxu0 %v1022
    %1055 = vmatpush1.msra.mxu0 %v1021
    %1056 = vmatprep.subr.mxu0 %v1020
    %1057 = vmatpush1.msra.mxu0 %v1019
    %1058 = vmatprep.subr.mxu0 %v1018
    %1059 = vmatpush1.msra.mxu0 %v1017
    %1060 = vmatprep.subr.mxu0 %v1016
    %1061 = vmatpush1.msra.mxu0 %v1015
    %1062 = vmatprep.subr.mxu0 %v1014
    %1063 = vmatpush1.msra.mxu0 %v1013
    %1064 = vmatprep.subr.mxu0 0.0
    %1065 = vmatpush2.msra.mxu0 0.0
    %1066 = vmatprep.subr.mxu0 0.0
    %1067 = vmatpush2.msra.mxu0 0.0
    %1068 = vmatprep.subr.mxu0 0.0
    %1069 = vmatpush2.msra.mxu0 0.0
    %1070 = vmatprep.subr.mxu0 0.0
    %1071 = vmatpush2.msra.mxu0 0.0
    %1072 = vmatprep.subr.mxu0 0.0
    %1073 = vmatpush2.msra.mxu0 0.0
    %1074 = vmatprep.subr.mxu0 0.0
    %1075 = vmatpush2.msra.mxu0 0.0
    %1076 = vmatprep.subr.mxu0 0.0
    %1077 = vmatpush2.msra.mxu0 0.0
    %1078 = vmatprep.subr.mxu0 0.0
    %1079 = vmatpush2.msra.mxu0 0.0
    %1080 = vmatprep.subr.mxu0 0.0
    %1081 = vmatpush2.msra.mxu0 0.0
    %1082 = vmatprep.subr.mxu0 0.0
    %1083 = vmatpush2.msra.mxu0 0.0
    %1084 = vmatprep.subr.mxu0 0.0
    %1085 = vmatpush2.msra.mxu0 0.0
    %1086 = vmatprep.subr.mxu0 0.0
    %1087 = vmatpush2.msra.mxu0 0.0
    %1088 = vmatprep.subr.mxu0 0.0
    %1089 = vmatpush2.msra.mxu0 0.0
    %1090 = vmatprep.subr.mxu0 0.0
    %1091 = vmatpush2.msra.mxu0 0.0
    %1092 = vmatprep.subr.mxu0 0.0
    %1093 = vmatpush2.msra.mxu0 0.0
    %1094 = vmatprep.subr.mxu0 0.0
    %1095 = vmatpush2.msra.mxu0 0.0
    %1096 = vmatprep.mubr.f32.mxu0 0.0
    %1097 = vmatmul.mubr.f32.gmra.mxu0 %v1030
    %v1098 = vpop.f32.mrf.mxu0
    %v1099 = vadd.f32 0.0, %v1098
    %v1100 = vpop.f32.mrf.mxu0
    %v1101 = vadd.f32 0.0, %v1100
    %1102 = vdwg.mxu0
    %v1104 = vrot.slane %v1099, 6
    %v1106 = vadd.f32 %v136, %v1104
    %v1108 = vrot.slane %v1101, 4
    %v1110 = vadd.f32 %v132, %v1108
    %v1111 = vxor.u32 %v1106, 2147483648
    %v1112 = vmul.f32 %v1111, 1.442695
    %v1113 = vpow.pop %v1112
    %v1114 = vadd.f32 %v1113, 1.0
    %v1115 = vrcp.pop %v1114
    %v1116 = vmul.f32 1.0, %v1115
    %v1117 = vtanh.pop %v1106
    %v1118 = vxor.u32 %v1110, 2147483648
    %v1119 = vmul.f32 %v1118, 1.442695
    %v1120 = vpow.pop %v1119
    %v1121 = vadd.f32 %v1120, 1.0
    %v1122 = vrcp.pop %v1121
    %v1123 = vmul.f32 1.0, %v1122
    %v1124 = vtanh.pop %v1110
    %v1126 = vrot.slane %v1007, 6
    %1127 = vrot.lane.b32.xlu0 %v1126, 32
    %v1128 = vpop.permute.xlu0 %1127
    %v1130 = vmul.f32 %v1116, %v1128
    %1132 = vrot.lane.b32.xlu0 %v1117, 64
    %v1133 = vpop.permute.xlu0 %1132
    %v1135 = vmul.f32 %v1116, %v1133
    %1137 = vrot.lane.b32.xlu0 %v1135, 32
    %v1138 = vpop.permute.xlu0 %1137
    %v1140 = vadd.f32 %v1130, %v1138
    %v1141 = vrot.slane %v1007, 4
    %v1143 = vmul.f32 %v1123, %v1141
    %1145 = vrot.lane.b32.xlu0 %v1124, 64
    %v1146 = vpop.permute.xlu0 %1145
    %v1148 = vmul.f32 %v1123, %v1146
    %1150 = vrot.lane.b32.xlu0 %v1148, 32
    %v1151 = vpop.permute.xlu0 %1150
    %v1153 = vadd.f32 %v1143, %v1151
    %v1154 = vtanh.pop %v1140
    %1156 = vrot.lane.b32.xlu0 %v1154, 64
    %v1157 = vpop.permute.xlu0 %1156
    %v1159 = vmul.f32 %v1116, %v1157
    %v1160 = vtanh.pop %v1153
    %1162 = vrot.lane.b32.xlu0 %v1160, 64
    %v1163 = vpop.permute.xlu0 %1162
    %v1165 = vmul.f32 %v1123, %v1163
    %1167 = vrot.lane.b32.xlu0 %v1159, 32
    %v1168 = vpop.permute.xlu0 %1167
    %v1171 = vrot.slane %v1165, 2
    %1172 = vrot.lane.b32.xlu0 %v1171, 64
    %v1173 = vpop.permute.xlu0 %1172
    %v1175 = vsel %vm293, %v1168, %v1173
    %1177 = vrot.lane.b32.xlu0 %v1140, 96
    %v1178 = vpop.permute.xlu0 %1177
    %v1181 = vrot.slane %v1153, 2
    %v1183 = vsel %vm293, %v1178, %v1181
    %1184 = vst.msk [vmem:[#allocation2 + $0x8] sm:$0xc] %vm481, %v1168
    %1185 = vrot.lane.b32.xlu0 %v1165, 64
    %v1186 = vpop.permute.xlu0 %1185
    %1188 = vst.msk [vmem:[#allocation2] sm:$0x30] %vm486, %v1186
    %v1189 = vld [vmem:[#allocation3] sm:$0xff]
    %v1190 = vld [vmem:[#allocation3 + $0x8] sm:$0xff]
    %v1191 = vld [vmem:[#allocation3 + $0x10] sm:$0xff]
    %v1192 = vld [vmem:[#allocation3 + $0x18] sm:$0xff]
    %v1193 = vld [vmem:[#allocation3 + $0x20] sm:$0xff]
    %v1194 = vld [vmem:[#allocation3 + $0x28] sm:$0xff]
    %v1195 = vld [vmem:[#allocation3 + $0x30] sm:$0xff]
    %v1196 = vld [vmem:[#allocation3 + $0x38] sm:$0xff]
    %v1197 = vld [vmem:[#allocation3 + $0x40] sm:$0xff]
    %v1198 = vld [vmem:[#allocation3 + $0x48] sm:$0xff]
    %v1199 = vld [vmem:[#allocation3 + $0x50] sm:$0xff]
    %v1200 = vld [vmem:[#allocation3 + $0x58] sm:$0xff]
    %v1201 = vld [vmem:[#allocation3 + $0x60] sm:$0xff]
    %v1202 = vld [vmem:[#allocation3 + $0x68] sm:$0xff]
    %v1203 = vld [vmem:[#allocation3 + $0x70] sm:$0xff]
    %v1204 = vld [vmem:[#allocation3 + $0x78] sm:$0xff]
    %v1206 = vrot.slane %v1175, 2
    %v1207 = vsel %vm156, %v1206, 0
    %1209 = vmatprep.subr.mxu0 0.0
    %1210 = vmatpush1.msra.mxu0 0.0
    %1211 = vmatprep.subr.mxu0 0.0
    %1212 = vmatpush1.msra.mxu0 0.0
    %1213 = vmatprep.subr.mxu0 0.0
    %1214 = vmatpush1.msra.mxu0 0.0
    %1215 = vmatprep.subr.mxu0 0.0
    %1216 = vmatpush1.msra.mxu0 0.0
    %1217 = vmatprep.subr.mxu0 0.0
    %1218 = vmatpush1.msra.mxu0 0.0
    %1219 = vmatprep.subr.mxu0 0.0
    %1220 = vmatpush1.msra.mxu0 0.0
    %1221 = vmatprep.subr.mxu0 0.0
    %1222 = vmatpush1.msra.mxu0 0.0
    %1223 = vmatprep.subr.mxu0 0.0
    %1224 = vmatpush1.msra.mxu0 0.0
    %1225 = vmatprep.subr.mxu0 %v1204
    %1226 = vmatpush1.msra.mxu0 %v1203
    %1227 = vmatprep.subr.mxu0 %v1202
    %1228 = vmatpush1.msra.mxu0 %v1201
    %1229 = vmatprep.subr.mxu0 %v1200
    %1230 = vmatpush1.msra.mxu0 %v1199
    %1231 = vmatprep.subr.mxu0 %v1198
    %1232 = vmatpush1.msra.mxu0 %v1197
    %1233 = vmatprep.subr.mxu0 %v1196
    %1234 = vmatpush1.msra.mxu0 %v1195
    %1235 = vmatprep.subr.mxu0 %v1194
    %1236 = vmatpush1.msra.mxu0 %v1193
    %1237 = vmatprep.subr.mxu0 %v1192
    %1238 = vmatpush1.msra.mxu0 %v1191
    %1239 = vmatprep.subr.mxu0 %v1190
    %1240 = vmatpush1.msra.mxu0 %v1189
    %1241 = vmatprep.subr.mxu0 0.0
    %1242 = vmatpush2.msra.mxu0 0.0
    %1243 = vmatprep.subr.mxu0 0.0
    %1244 = vmatpush2.msra.mxu0 0.0
    %1245 = vmatprep.subr.mxu0 0.0
    %1246 = vmatpush2.msra.mxu0 0.0
    %1247 = vmatprep.subr.mxu0 0.0
    %1248 = vmatpush2.msra.mxu0 0.0
    %1249 = vmatprep.subr.mxu0 0.0
    %1250 = vmatpush2.msra.mxu0 0.0
    %1251 = vmatprep.subr.mxu0 0.0
    %1252 = vmatpush2.msra.mxu0 0.0
    %1253 = vmatprep.subr.mxu0 0.0
    %1254 = vmatpush2.msra.mxu0 0.0
    %1255 = vmatprep.subr.mxu0 0.0
    %1256 = vmatpush2.msra.mxu0 0.0
    %1257 = vmatprep.subr.mxu0 0.0
    %1258 = vmatpush2.msra.mxu0 0.0
    %1259 = vmatprep.subr.mxu0 0.0
    %1260 = vmatpush2.msra.mxu0 0.0
    %1261 = vmatprep.subr.mxu0 0.0
    %1262 = vmatpush2.msra.mxu0 0.0
    %1263 = vmatprep.subr.mxu0 0.0
    %1264 = vmatpush2.msra.mxu0 0.0
    %1265 = vmatprep.subr.mxu0 0.0
    %1266 = vmatpush2.msra.mxu0 0.0
    %1267 = vmatprep.subr.mxu0 0.0
    %1268 = vmatpush2.msra.mxu0 0.0
    %1269 = vmatprep.subr.mxu0 0.0
    %1270 = vmatpush2.msra.mxu0 0.0
    %1271 = vmatprep.subr.mxu0 0.0
    %1272 = vmatpush2.msra.mxu0 0.0
    %1273 = vmatprep.mubr.f32.mxu0 0.0
    %1274 = vmatmul.mubr.f32.gmra.mxu0 %v1207
    %v1275 = vpop.f32.mrf.mxu0
    %v1276 = vadd.f32 0.0, %v1275
    %v1277 = vpop.f32.mrf.mxu0
    %v1278 = vadd.f32 0.0, %v1277
    %1279 = vdwg.mxu0
    %v1281 = vrot.slane %v1276, 4
    %v1283 = vadd.f32 %v136, %v1281
    %v1285 = vrot.slane %v1278, 6
    %v1287 = vadd.f32 %v132, %v1285
    %v1288 = vxor.u32 %v1283, 2147483648
    %v1289 = vmul.f32 %v1288, 1.442695
    %v1290 = vpow.pop %v1289
    %v1291 = vadd.f32 %v1290, 1.0
    %v1292 = vrcp.pop %v1291
    %v1293 = vmul.f32 1.0, %v1292
    %v1294 = vtanh.pop %v1283
    %v1295 = vxor.u32 %v1287, 2147483648
    %v1296 = vmul.f32 %v1295, 1.442695
    %v1297 = vpow.pop %v1296
    %v1298 = vadd.f32 %v1297, 1.0
    %v1299 = vrcp.pop %v1298
    %v1300 = vmul.f32 1.0, %v1299
    %v1301 = vtanh.pop %v1287
    %v1303 = vrot.slane %v1183, 6
    %1304 = vrot.lane.b32.xlu0 %v1303, 32
    %v1305 = vpop.permute.xlu0 %1304
    %v1307 = vmul.f32 %v1293, %v1305
    %1309 = vrot.lane.b32.xlu0 %v1294, 64
    %v1310 = vpop.permute.xlu0 %1309
    %v1312 = vmul.f32 %v1293, %v1310
    %1314 = vrot.lane.b32.xlu0 %v1312, 32
    %v1315 = vpop.permute.xlu0 %1314
    %v1317 = vadd.f32 %v1307, %v1315
    %v1318 = vmul.f32 %v1300, %v1183
    %1320 = vrot.lane.b32.xlu0 %v1301, 64
    %v1321 = vpop.permute.xlu0 %1320
    %v1323 = vmul.f32 %v1300, %v1321
    %1325 = vrot.lane.b32.xlu0 %v1323, 32
    %v1326 = vpop.permute.xlu0 %1325
    %v1328 = vadd.f32 %v1318, %v1326
    %v1329 = vtanh.pop %v1317
    %1331 = vrot.lane.b32.xlu0 %v1329, 64
    %v1332 = vpop.permute.xlu0 %1331
    %v1334 = vmul.f32 %v1293, %v1332
    %v1335 = vtanh.pop %v1328
    %1337 = vrot.lane.b32.xlu0 %v1335, 64
    %v1338 = vpop.permute.xlu0 %1337
    %v1340 = vmul.f32 %v1300, %v1338
    %1342 = vrot.lane.b32.xlu0 %v1334, 32
    %v1343 = vpop.permute.xlu0 %1342
    %v1346 = vrot.slane %v1340, 6
    %1347 = vrot.lane.b32.xlu0 %v1346, 64
    %v1348 = vpop.permute.xlu0 %1347
    %v1350 = vsel %vm293, %v1343, %v1348
    %1352 = vrot.lane.b32.xlu0 %v1317, 96
    %v1353 = vpop.permute.xlu0 %1352
    %v1356 = vrot.slane %v1328, 6
    %v1358 = vsel %vm293, %v1353, %v1356
    %1359 = vst.msk [vmem:[#allocation2 + $0x8] sm:$0x30] %vm658, %v1343
    %1360 = vrot.lane.b32.xlu0 %v1340, 64
    %v1361 = vpop.permute.xlu0 %1360
    %1363 = vst.msk [vmem:[#allocation2] sm:$0xc] %vm663, %v1361
    %v1364 = vld [vmem:[#allocation3] sm:$0xff]
    %v1365 = vld [vmem:[#allocation3 + $0x8] sm:$0xff]
    %v1366 = vld [vmem:[#allocation3 + $0x10] sm:$0xff]
    %v1367 = vld [vmem:[#allocation3 + $0x18] sm:$0xff]
    %v1368 = vld [vmem:[#allocation3 + $0x20] sm:$0xff]
    %v1369 = vld [vmem:[#allocation3 + $0x28] sm:$0xff]
    %v1370 = vld [vmem:[#allocation3 + $0x30] sm:$0xff]
    %v1371 = vld [vmem:[#allocation3 + $0x38] sm:$0xff]
    %v1372 = vld [vmem:[#allocation3 + $0x40] sm:$0xff]
    %v1373 = vld [vmem:[#allocation3 + $0x48] sm:$0xff]
    %v1374 = vld [vmem:[#allocation3 + $0x50] sm:$0xff]
    %v1375 = vld [vmem:[#allocation3 + $0x58] sm:$0xff]
    %v1376 = vld [vmem:[#allocation3 + $0x60] sm:$0xff]
    %v1377 = vld [vmem:[#allocation3 + $0x68] sm:$0xff]
    %v1378 = vld [vmem:[#allocation3 + $0x70] sm:$0xff]
    %v1379 = vld [vmem:[#allocation3 + $0x78] sm:$0xff]
    %v1381 = vrot.slane %v1350, 4
    %v1382 = vsel %vm156, %v1381, 0
    %1384 = vmatprep.subr.mxu0 0.0
    %1385 = vmatpush1.msra.mxu0 0.0
    %1386 = vmatprep.subr.mxu0 0.0
    %1387 = vmatpush1.msra.mxu0 0.0
    %1388 = vmatprep.subr.mxu0 0.0
    %1389 = vmatpush1.msra.mxu0 0.0
    %1390 = vmatprep.subr.mxu0 0.0
    %1391 = vmatpush1.msra.mxu0 0.0
    %1392 = vmatprep.subr.mxu0 0.0
    %1393 = vmatpush1.msra.mxu0 0.0
    %1394 = vmatprep.subr.mxu0 0.0
    %1395 = vmatpush1.msra.mxu0 0.0
    %1396 = vmatprep.subr.mxu0 0.0
    %1397 = vmatpush1.msra.mxu0 0.0
    %1398 = vmatprep.subr.mxu0 0.0
    %1399 = vmatpush1.msra.mxu0 0.0
    %1400 = vmatprep.subr.mxu0 %v1379
    %1401 = vmatpush1.msra.mxu0 %v1378
    %1402 = vmatprep.subr.mxu0 %v1377
    %1403 = vmatpush1.msra.mxu0 %v1376
    %1404 = vmatprep.subr.mxu0 %v1375
    %1405 = vmatpush1.msra.mxu0 %v1374
    %1406 = vmatprep.subr.mxu0 %v1373
    %1407 = vmatpush1.msra.mxu0 %v1372
    %1408 = vmatprep.subr.mxu0 %v1371
    %1409 = vmatpush1.msra.mxu0 %v1370
    %1410 = vmatprep.subr.mxu0 %v1369
    %1411 = vmatpush1.msra.mxu0 %v1368
    %1412 = vmatprep.subr.mxu0 %v1367
    %1413 = vmatpush1.msra.mxu0 %v1366
    %1414 = vmatprep.subr.mxu0 %v1365
    %1415 = vmatpush1.msra.mxu0 %v1364
    %1416 = vmatprep.subr.mxu0 0.0
    %1417 = vmatpush2.msra.mxu0 0.0
    %1418 = vmatprep.subr.mxu0 0.0
    %1419 = vmatpush2.msra.mxu0 0.0
    %1420 = vmatprep.subr.mxu0 0.0
    %1421 = vmatpush2.msra.mxu0 0.0
    %1422 = vmatprep.subr.mxu0 0.0
    %1423 = vmatpush2.msra.mxu0 0.0
    %1424 = vmatprep.subr.mxu0 0.0
    %1425 = vmatpush2.msra.mxu0 0.0
    %1426 = vmatprep.subr.mxu0 0.0
    %1427 = vmatpush2.msra.mxu0 0.0
    %1428 = vmatprep.subr.mxu0 0.0
    %1429 = vmatpush2.msra.mxu0 0.0
    %1430 = vmatprep.subr.mxu0 0.0
    %1431 = vmatpush2.msra.mxu0 0.0
    %1432 = vmatprep.subr.mxu0 0.0
    %1433 = vmatpush2.msra.mxu0 0.0
    %1434 = vmatprep.subr.mxu0 0.0
    %1435 = vmatpush2.msra.mxu0 0.0
    %1436 = vmatprep.subr.mxu0 0.0
    %1437 = vmatpush2.msra.mxu0 0.0
    %1438 = vmatprep.subr.mxu0 0.0
    %1439 = vmatpush2.msra.mxu0 0.0
    %1440 = vmatprep.subr.mxu0 0.0
    %1441 = vmatpush2.msra.mxu0 0.0
    %1442 = vmatprep.subr.mxu0 0.0
    %1443 = vmatpush2.msra.mxu0 0.0
    %1444 = vmatprep.subr.mxu0 0.0
    %1445 = vmatpush2.msra.mxu0 0.0
    %1446 = vmatprep.subr.mxu0 0.0
    %1447 = vmatpush2.msra.mxu0 0.0
    %1448 = vmatprep.mubr.f32.mxu0 0.0
    %1449 = vmatmul.mubr.f32.gmra.mxu0 %v1382
    %v1450 = vpop.f32.mrf.mxu0
    %v1451 = vadd.f32 0.0, %v1450
    %v1452 = vpop.f32.mrf.mxu0
    %v1453 = vadd.f32 0.0, %v1452
    %1454 = vdwg.mxu0
    %v1456 = vrot.slane %v1451, 2
    %v1458 = vadd.f32 %v136, %v1456
    %v1459 = vadd.f32 %v132, %v1453
    %v1460 = vxor.u32 %v1458, 2147483648
    %v1461 = vmul.f32 %v1460, 1.442695
    %v1462 = vpow.pop %v1461
    %v1463 = vadd.f32 %v1462, 1.0
    %v1464 = vrcp.pop %v1463
    %v1465 = vmul.f32 1.0, %v1464
    %v1466 = vtanh.pop %v1458
    %v1467 = vxor.u32 %v1459, 2147483648
    %v1468 = vmul.f32 %v1467, 1.442695
    %v1469 = vpow.pop %v1468
    %v1470 = vadd.f32 %v1469, 1.0
    %v1471 = vrcp.pop %v1470
    %v1472 = vmul.f32 1.0, %v1471
    %v1473 = vtanh.pop %v1459
    %v1475 = vrot.slane %v1358, 6
    %1476 = vrot.lane.b32.xlu0 %v1475, 32
    %v1477 = vpop.permute.xlu0 %1476
    %v1479 = vmul.f32 %v1465, %v1477
    %1481 = vrot.lane.b32.xlu0 %v1466, 64
    %v1482 = vpop.permute.xlu0 %1481
    %v1484 = vmul.f32 %v1465, %v1482
    %1486 = vrot.lane.b32.xlu0 %v1484, 32
    %v1487 = vpop.permute.xlu0 %1486
    %v1489 = vadd.f32 %v1479, %v1487
    %v1490 = vrot.slane %v1358, 4
    %v1492 = vmul.f32 %v1472, %v1490
    %1494 = vrot.lane.b32.xlu0 %v1473, 64
    %v1495 = vpop.permute.xlu0 %1494
    %v1497 = vmul.f32 %v1472, %v1495
    %1499 = vrot.lane.b32.xlu0 %v1497, 32
    %v1500 = vpop.permute.xlu0 %1499
    %v1502 = vadd.f32 %v1492, %v1500
    %v1503 = vtanh.pop %v1489
    %1505 = vrot.lane.b32.xlu0 %v1503, 64
    %v1506 = vpop.permute.xlu0 %1505
    %v1508 = vmul.f32 %v1465, %v1506
    %v1509 = vtanh.pop %v1502
    %1511 = vrot.lane.b32.xlu0 %v1509, 64
    %v1512 = vpop.permute.xlu0 %1511
    %v1514 = vmul.f32 %v1472, %v1512
    %1516 = vrot.lane.b32.xlu0 %v1508, 32
    %v1517 = vpop.permute.xlu0 %1516
    %1519 = vst.msk [vmem:[#allocation2 + $0x8] sm:$0xc0] %vm834, %v1517
    %1521 = vrot.lane.b32.xlu0 %v1514, 64
    %v1522 = vpop.permute.xlu0 %1521
    %1524 = vst.msk [vmem:[#allocation2] sm:$0x3] %vm839, %v1522
    %v1525 = vld [vmem:[#allocation2] sm:$0xff]
    %v1526 = vld [vmem:[#allocation2 + $0x8] sm:$0xff]
    %v1527 = vld [vmem:[%s4] sm:$0xff]
    %v1528 = vld [vmem:[%s4 + $0x8] sm:$0xff]
    %v1529 = vld [vmem:[%s4 + $0x10] sm:$0xff]
    %v1530 = vld [vmem:[%s4 + $0x18] sm:$0xff]
    %v1531 = vld [vmem:[%s4 + $0x20] sm:$0xff]
    %v1532 = vld [vmem:[%s4 + $0x28] sm:$0xff]
    %v1533 = vld [vmem:[%s4 + $0x30] sm:$0xff]
    %v1534 = vld [vmem:[%s4 + $0x38] sm:$0xff]
    %v1535 = vld [vmem:[%s5] sm:$0x1]
    %v1537 = vlaneseq
    %v1538 = vshrl.u32 %v1537, 7
    %v1539 = vsub.s32 0, %v1538
    %v1540 = vrot.slane %v1535, %v1539
    %v1543 = vsel %vm156, %v1525, 0
    %v1546 = vsel %vm156, %v1526, 0
    %1548 = vmatprep.subr.mxu0 0.0
    %1549 = vmatpush1.msra.mxu0 0.0
    %1550 = vmatprep.subr.mxu0 0.0
    %1551 = vmatpush1.msra.mxu0 0.0
    %1552 = vmatprep.subr.mxu0 0.0
    %1553 = vmatpush1.msra.mxu0 0.0
    %1554 = vmatprep.subr.mxu0 0.0
    %1555 = vmatpush1.msra.mxu0 0.0
    %1556 = vmatprep.subr.mxu0 0.0
    %1557 = vmatpush1.msra.mxu0 0.0
    %1558 = vmatprep.subr.mxu0 0.0
    %1559 = vmatpush1.msra.mxu0 0.0
    %1560 = vmatprep.subr.mxu0 0.0
    %1561 = vmatpush1.msra.mxu0 0.0
    %1562 = vmatprep.subr.mxu0 0.0
    %1563 = vmatpush1.msra.mxu0 0.0
    %1564 = vmatprep.subr.mxu0 0.0
    %1565 = vmatpush1.msra.mxu0 %v1534
    %1566 = vmatprep.subr.mxu0 0.0
    %1567 = vmatpush1.msra.mxu0 %v1533
    %1568 = vmatprep.subr.mxu0 0.0
    %1569 = vmatpush1.msra.mxu0 %v1532
    %1570 = vmatprep.subr.mxu0 0.0
    %1571 = vmatpush1.msra.mxu0 %v1531
    %1572 = vmatprep.subr.mxu0 0.0
    %1573 = vmatpush1.msra.mxu0 %v1530
    %1574 = vmatprep.subr.mxu0 0.0
    %1575 = vmatpush1.msra.mxu0 %v1529
    %1576 = vmatprep.subr.mxu0 0.0
    %1577 = vmatpush1.msra.mxu0 %v1528
    %1578 = vmatprep.subr.mxu0 0.0
    %1579 = vmatpush1.msra.mxu0 %v1527
    %1580 = vmatprep.subr.mxu0 0.0
    %1581 = vmatpush2.msra.mxu0 0.0
    %1582 = vmatprep.subr.mxu0 0.0
    %1583 = vmatpush2.msra.mxu0 0.0
    %1584 = vmatprep.subr.mxu0 0.0
    %1585 = vmatpush2.msra.mxu0 0.0
    %1586 = vmatprep.subr.mxu0 0.0
    %1587 = vmatpush2.msra.mxu0 0.0
    %1588 = vmatprep.subr.mxu0 0.0
    %1589 = vmatpush2.msra.mxu0 0.0
    %1590 = vmatprep.subr.mxu0 0.0
    %1591 = vmatpush2.msra.mxu0 0.0
    %1592 = vmatprep.subr.mxu0 0.0
    %1593 = vmatpush2.msra.mxu0 0.0
    %1594 = vmatprep.subr.mxu0 0.0
    %1595 = vmatpush2.msra.mxu0 0.0
    %1596 = vmatprep.subr.mxu0 0.0
    %1597 = vmatpush2.msra.mxu0 0.0
    %1598 = vmatprep.subr.mxu0 0.0
    %1599 = vmatpush2.msra.mxu0 0.0
    %1600 = vmatprep.subr.mxu0 0.0
    %1601 = vmatpush2.msra.mxu0 0.0
    %1602 = vmatprep.subr.mxu0 0.0
    %1603 = vmatpush2.msra.mxu0 0.0
    %1604 = vmatprep.subr.mxu0 0.0
    %1605 = vmatpush2.msra.mxu0 0.0
    %1606 = vmatprep.subr.mxu0 0.0
    %1607 = vmatpush2.msra.mxu0 0.0
    %1608 = vmatprep.subr.mxu0 0.0
    %1609 = vmatpush2.msra.mxu0 0.0
    %1610 = vmatprep.subr.mxu0 0.0
    %1611 = vmatpush2.msra.mxu0 0.0
    %1612 = vmatprep.mubr.f32.mxu0 0.0
    %1613 = vmatmul.mubr.f32.gmra.mxu0 %v1543
    %v1614 = vpop.f32.mrf.mxu0
    %v1615 = vadd.f32 %v1540, %v1614
    %v1616 = vpop.f32.mrf.mxu0
    %1617 = vmatprep.mubr.f32.mxu0 0.0
    %1618 = vmatmul.mubr.f32.gmra.mxu0 %v1546
    %v1619 = vpop.f32.mrf.mxu0
    %v1620 = vadd.f32 %v1540, %v1619
    %v1621 = vpop.f32.mrf.mxu0
    %1622 = vdwg.mxu0
    %1623 = vst.msk [vmem:[#allocation6] sm:$0xff] %vm56, %v1615
    %1624 = vst.msk [vmem:[#allocation6 + $0x8] sm:$0xff] %vm56, %v1620
    // Predicated region
    $region30: #{tpu_custom_call.1} parent=1 // pred_check
      _
    $region31: #{tpu_custom_call.1} parent=1 // pred_check_branch
      %1626 = sbr.rel (0) target = $region33
    $region32: #{tpu_custom_call.1} parent=1 // pred_region
      %s1628 = ssub.s32 256, 256
      %1629 = vsyncadd [#allocation5], %s1628
      %s1630 = sshll.u32 [#allocation6], 4
      %s1631 = int_to_ptr.vmem [resolvable:$true] %s1630
      %1636 = dma.vmem_to_hbm [thread:$0]  %s1631, 256, %s6, [#allocation5], 128, 128, 8
    $region33: #{tpu_custom_call.1} parent=1 // pred_fallthru
      _
    // Predicated region
    $region34: #{tpu_custom_call.1} parent=1 // pred_check
      _
    $region35: #{tpu_custom_call.1} parent=1 // pred_check_branch
      %1638 = sbr.rel (0) target = $region37
    $region36: #{tpu_custom_call.1} parent=1 // pred_region
      %1639 = dma.done [#allocation5], 256
    $region37: #{tpu_custom_call.1} parent=1 // pred_fallthru
      _
    %1640 = vsyncpa [#allocation4], 1
    %1641 = vsyncpa [#allocation5], 1

</llo_original>
